<compile_context>
chip_gen: v5e
topology: v5e:2x2
jax: 0.10.0
libtpu: 0.0.40
codegen_flags: <defaults>
</compile_context>

<pallas_src>
import functools

import jax
import jax.numpy as jnp
from jax.experimental import pallas as pl
from jax.experimental.pallas import tpu as pltpu


# ----------------------------------------------------------------------------
# CrossNorm (StyleCross 'id' mode) kernel
# ----------------------------------------------------------------------------
def _crossnorm_pair_kernel(x_ref, o_ref, *, eps):
    """x_ref / o_ref: (2, TB, C, HW). Halves 0 and 1 swap per-(n, c) spatial statistics."""
    hw = x_ref.shape[-1]
    inv_hw = 1.0 / hw
    # torch.var default is unbiased (ddof=1); guard HW == 1 (torch would emit NaN there).
    inv_hw1 = 1.0 / max(hw - 1, 1)

    def _stats(v):  # v: (TB, C, HW) f32 -> mean, var over the spatial (lane) axis
        s = jnp.sum(v, axis=-1)
        sq = jnp.sum(v * v, axis=-1)
        mean = s * inv_hw
        # single-pass variance; clamp tiny negatives from f32 cancellation
        var = jnp.maximum((sq - s * s * inv_hw) * inv_hw1, 0.0)
        return mean, var

    # Stats always in f32 (reduction precision); only the stats path up-casts.
    x0f = x_ref[0].astype(jnp.float32)   # content half 0 == style source for half 1
    x1f = x_ref[1].astype(jnp.float32)   # content half 1 == style source for half 0
    m0, v0 = _stats(x0f)
    m1, v1 = _stats(x1f)

    std0 = jnp.sqrt(v0 + eps)
    std1 = jnp.sqrt(v1 + eps)
    inv_std0 = jax.lax.rsqrt(v0 + eps)   # EUP rsqrt: avoids a VPU divide
    inv_std1 = jax.lax.rsqrt(v1 + eps)

    # out_p = (x_p - mean_p)/std_p * std_q + mean_q  ==  x_p * scale_p + shift_p
    scale0 = std1 * inv_std0             # (TB, C)
    shift0 = m1 - m0 * scale0
    scale1 = std0 * inv_std1
    shift1 = m0 - m1 * scale1

    # Big elementwise pass in the input dtype (no second full f32 copy for bf16 inputs);
    # the per-(N, C) broadcast is hoisted — one broadcast per half.
    in_dt = x_ref.dtype
    o_ref[0] = (x_ref[0] * scale0.astype(in_dt)[..., None]
                + shift0.astype(in_dt)[..., None]).astype(o_ref.dtype)
    o_ref[1] = (x_ref[1] * scale1.astype(in_dt)[..., None]
                + shift1.astype(in_dt)[..., None]).astype(o_ref.dtype)


def _pick_tb(half, c, hw, itemsize, budget_bytes):
    """Largest batch tile (divisor of B//2) whose pipelined working set fits the budget.

    Budget should be chosen for the smallest-VMEM target (v7x: 64 MiB physical, ~32 MiB
    scoped default), so the same code stays 2-deep pipelined on every generation.
    """
    # in block + out block, double-buffered, + f32 temporaries => ~6x one pair-block.
    per_tb = 2 * c * hw * max(itemsize, 4) * 6
    tb = max(1, min(half, budget_bytes // max(per_tb, 1)))
    while half % tb:
        tb -= 1
    return tb


def crossnorm_id_forward(x_nchw, *, eps=1e-5, tb=None,
                         vmem_budget_bytes=24 * 1024 * 1024):
    """StyleCross 'id' mode (crop='neither', lam=None): swap instance stats between batch halves."""
    b, c, h, w = x_nchw.shape
    assert b % 2 == 0, "StyleCross 'id' mode pairs batch halves; batch must be even"
    # TODO(synk): odd-batch roll (non-pairing permutation) would need a gather-style index_map.
    half = b // 2
    hw = h * w
    itemsize = x_nchw.dtype.itemsize

    # Free view: pair p of the batch sits at [0, p] (content k) and [1, p] (content k + B/2).
    x_pairs = x_nchw.reshape(2, half, c, hw)

    if tb is None:
        tb = _pick_tb(half, c, hw, itemsize, vmem_budget_bytes)
    assert half % tb == 0, "batch tile must divide B//2"

    block = (2, tb, c, hw)
    block_bytes = 2 * tb * c * hw * itemsize
    grid = (half // tb,)

    cost = pl.CostEstimate(
        flops=int(7 * b * c * hw),              # 2 reduction sweeps + affine
        transcendentals=int(2 * b * c),         # sqrt + rsqrt per (n, c)
        bytes_accessed=int(2 * b * c * hw * itemsize),  # read once + write once
    )

    out = pl.pallas_call(
        functools.partial(_crossnorm_pair_kernel, eps=float(eps)),
        out_shape=jax.ShapeDtypeStruct((2, half, c, hw), x_nchw.dtype),
        grid=grid,
        in_specs=[pl.BlockSpec(block, lambda k: (0, k, 0, 0))],
        out_specs=pl.BlockSpec(block, lambda k: (0, k, 0, 0)),
        compiler_params=pltpu.CompilerParams(
            dimension_semantics=("parallel",),   # shards grid steps across v7x's 2 TCs
            vmem_limit_bytes=int(min(56 * 1024 * 1024,
                                     max(16 * 1024 * 1024, 10 * block_bytes))),
        ),
        cost_estimate=cost,
    )(x_pairs)
    return out.reshape(b, c, h, w)


# ----------------------------------------------------------------------------
# F.normalize(dim=-1) epilogue kernel (tiny feature vectors)
# ----------------------------------------------------------------------------
def _l2_normalize_kernel(v_ref, o_ref, *, eps):
    v = v_ref[...].astype(jnp.float32)
    ss = jnp.sum(v * v, axis=-1, keepdims=True)
    inv = 1.0 / jnp.maximum(jnp.sqrt(ss), eps)   # torch F.normalize clamps the denominator
    o_ref[...] = (v * inv).astype(o_ref.dtype)


def l2_normalize(feats, *, eps=1e-12):
    # Feature vectors (B, 512) are a few KiB: a single VMEM block is the right call here.
    vmem = pl.BlockSpec(memory_space=pltpu.MemorySpace.VMEM)
    return pl.pallas_call(
        functools.partial(_l2_normalize_kernel, eps=float(eps)),
        out_shape=jax.ShapeDtypeStruct(feats.shape, feats.dtype),
        in_specs=[vmem],
        out_specs=vmem,
    )(feats)


# ----------------------------------------------------------------------------
# Pure-JAX references (match the PyTorch semantics)
# ----------------------------------------------------------------------------
def crossnorm_id_reference(x, eps=1e-5):
    b, c, h, w = x.shape
    xf = x.reshape(b, c, -1).astype(jnp.float32)
    mean = jnp.mean(xf, axis=-1)
    var = jnp.var(xf, axis=-1, ddof=1)            # torch.var default: unbiased
    std = jnp.sqrt(var + eps)
    idx = jnp.roll(jnp.arange(b), b // 2)         # == torch.arange(b).roll(b//2)
    s_mean, s_std = mean[idx], std[idx]
    out = (xf - mean[..., None]) / std[..., None] * s_std[..., None] + s_mean[..., None]
    return out.reshape(b, c, h, w).astype(x.dtype)


def l2_normalize_reference(v, eps=1e-12):
    n = jnp.linalg.norm(v.astype(jnp.float32), axis=-1, keepdims=True)
    return (v / jnp.maximum(n, eps)).astype(v.dtype)


if __name__ == "__main__":
    # Small shapes consistent with the module: an even batch of ResNet-stage feature maps
    # (id-mode pairs real/fake halves), plus flattened 512-d features for F.normalize.
    B, C, H, W = 4, 64, 16, 16
    FEAT = 512

    key = jax.random.PRNGKey(0)
    kx, kf = jax.random.split(key)
    x = jax.random.normal(kx, (B, C, H, W), dtype=jnp.float32)
    feats = jax.random.normal(kf, (B, FEAT), dtype=jnp.float32)

    out = crossnorm_id_forward(x)
    out = jax.block_until_ready(out)
    ref = crossnorm_id_reference(x)
    assert out.shape == (B, C, H, W)
    assert jnp.allclose(out, ref, atol=1e-4, rtol=1e-4), "crossnorm mismatch vs reference"

    nfeat = jax.block_until_ready(l2_normalize(feats))
    nref = l2_normalize_reference(feats)
    assert jnp.allclose(nfeat, nref, atol=1e-5, rtol=1e-5), "l2-normalize mismatch vs reference"

    print("KERNEL_OK")
</pallas_src>

<mosaic_0001>
module attributes {stable_mosaic.version = 11 : i64} {
  func.func @_crossnorm_pair_kernel(%arg0: i32, %arg1: memref<2x2x64x256xf32, #tpu.memory_space<vmem>>, %arg2: memref<2x2x64x256xf32, #tpu.memory_space<vmem>>) attributes {dimension_semantics = [#tpu.dimension_semantics<parallel>], iteration_bounds = array<i64: 1>, scalar_prefetch = 0 : i64, scratch_operands = 0 : i64, tpu.core_type = #tpu.core_type<tc>, window_params = [{transform_indices = @transform_0, window_bounds = array<i64: 2, 2, 64, 256>}, {transform_indices = @transform_1, window_bounds = array<i64: 2, 2, 64, 256>}]} {
    %c0 = arith.constant 0 : index
    %c0_0 = arith.constant 0 : index
    %c0_1 = arith.constant 0 : index
    %c0_2 = arith.constant 0 : index
    %0 = vector.load %arg1[%c0, %c0_0, %c0_1, %c0_2] : memref<2x2x64x256xf32, #tpu.memory_space<vmem>>, vector<1x2x64x256xf32>
    %1 = vector.shape_cast %0 : vector<1x2x64x256xf32> to vector<2x64x256xf32>
    %c1 = arith.constant 1 : index
    %c0_3 = arith.constant 0 : index
    %c0_4 = arith.constant 0 : index
    %c0_5 = arith.constant 0 : index
    %2 = vector.load %arg1[%c1, %c0_3, %c0_4, %c0_5] : memref<2x2x64x256xf32, #tpu.memory_space<vmem>>, vector<1x2x64x256xf32>
    %3 = vector.shape_cast %2 : vector<1x2x64x256xf32> to vector<2x64x256xf32>
    %cst = arith.constant dense<0.000000e+00> : vector<2x64xf32>
    %4 = vector.multi_reduction <add>, %1, %cst [2] : vector<2x64x256xf32> to vector<2x64xf32>
    %5 = arith.mulf %1, %1 : vector<2x64x256xf32>
    %cst_6 = arith.constant dense<0.000000e+00> : vector<2x64xf32>
    %6 = vector.multi_reduction <add>, %5, %cst_6 [2] : vector<2x64x256xf32> to vector<2x64xf32>
    %cst_7 = arith.constant 3.906250e-03 : f32
    %7 = vector.broadcast %cst_7 : f32 to vector<2x64xf32>
    %8 = arith.mulf %4, %7 : vector<2x64xf32>
    %9 = arith.mulf %4, %4 : vector<2x64xf32>
    %cst_8 = arith.constant 3.906250e-03 : f32
    %10 = vector.broadcast %cst_8 : f32 to vector<2x64xf32>
    %11 = arith.mulf %9, %10 : vector<2x64xf32>
    %12 = arith.subf %6, %11 : vector<2x64xf32>
    %cst_9 = arith.constant 0.00392156886 : f32
    %13 = vector.broadcast %cst_9 : f32 to vector<2x64xf32>
    %14 = arith.mulf %12, %13 : vector<2x64xf32>
    %cst_10 = arith.constant 0.000000e+00 : f32
    %15 = vector.broadcast %cst_10 : f32 to vector<2x64xf32>
    %16 = arith.maximumf %14, %15 : vector<2x64xf32>
    %cst_11 = arith.constant dense<0.000000e+00> : vector<2x64xf32>
    %17 = vector.multi_reduction <add>, %3, %cst_11 [2] : vector<2x64x256xf32> to vector<2x64xf32>
    %18 = arith.mulf %3, %3 : vector<2x64x256xf32>
    %cst_12 = arith.constant dense<0.000000e+00> : vector<2x64xf32>
    %19 = vector.multi_reduction <add>, %18, %cst_12 [2] : vector<2x64x256xf32> to vector<2x64xf32>
    %cst_13 = arith.constant 3.906250e-03 : f32
    %20 = vector.broadcast %cst_13 : f32 to vector<2x64xf32>
    %21 = arith.mulf %17, %20 : vector<2x64xf32>
    %22 = arith.mulf %17, %17 : vector<2x64xf32>
    %cst_14 = arith.constant 3.906250e-03 : f32
    %23 = vector.broadcast %cst_14 : f32 to vector<2x64xf32>
    %24 = arith.mulf %22, %23 : vector<2x64xf32>
    %25 = arith.subf %19, %24 : vector<2x64xf32>
    %cst_15 = arith.constant 0.00392156886 : f32
    %26 = vector.broadcast %cst_15 : f32 to vector<2x64xf32>
    %27 = arith.mulf %25, %26 : vector<2x64xf32>
    %cst_16 = arith.constant 0.000000e+00 : f32
    %28 = vector.broadcast %cst_16 : f32 to vector<2x64xf32>
    %29 = arith.maximumf %27, %28 : vector<2x64xf32>
    %cst_17 = arith.constant 9.99999974E-6 : f32
    %30 = vector.broadcast %cst_17 : f32 to vector<2x64xf32>
    %31 = arith.addf %16, %30 : vector<2x64xf32>
    %32 = math.sqrt %31 : vector<2x64xf32>
    %cst_18 = arith.constant 9.99999974E-6 : f32
    %33 = vector.broadcast %cst_18 : f32 to vector<2x64xf32>
    %34 = arith.addf %29, %33 : vector<2x64xf32>
    %35 = math.sqrt %34 : vector<2x64xf32>
    %cst_19 = arith.constant 9.99999974E-6 : f32
    %36 = vector.broadcast %cst_19 : f32 to vector<2x64xf32>
    %37 = arith.addf %16, %36 : vector<2x64xf32>
    %38 = math.rsqrt %37 : vector<2x64xf32>
    %cst_20 = arith.constant 9.99999974E-6 : f32
    %39 = vector.broadcast %cst_20 : f32 to vector<2x64xf32>
    %40 = arith.addf %29, %39 : vector<2x64xf32>
    %41 = math.rsqrt %40 : vector<2x64xf32>
    %42 = arith.mulf %35, %38 : vector<2x64xf32>
    %43 = arith.mulf %8, %42 : vector<2x64xf32>
    %44 = arith.subf %21, %43 : vector<2x64xf32>
    %45 = arith.mulf %32, %41 : vector<2x64xf32>
    %46 = arith.mulf %21, %45 : vector<2x64xf32>
    %47 = arith.subf %8, %46 : vector<2x64xf32>
    %c0_21 = arith.constant 0 : index
    %c0_22 = arith.constant 0 : index
    %c0_23 = arith.constant 0 : index
    %c0_24 = arith.constant 0 : index
    %48 = vector.load %arg1[%c0_21, %c0_22, %c0_23, %c0_24] : memref<2x2x64x256xf32, #tpu.memory_space<vmem>>, vector<1x2x64x256xf32>
    %49 = vector.shape_cast %48 : vector<1x2x64x256xf32> to vector<2x64x256xf32>
    %50 = vector.shape_cast %42 : vector<2x64xf32> to vector<2x64x1xf32>
    %51 = vector.broadcast %50 : vector<2x64x1xf32> to vector<2x64x256xf32>
    %52 = arith.mulf %49, %51 : vector<2x64x256xf32>
    %53 = vector.shape_cast %44 : vector<2x64xf32> to vector<2x64x1xf32>
    %54 = vector.broadcast %53 : vector<2x64x1xf32> to vector<2x64x256xf32>
    %55 = arith.addf %52, %54 : vector<2x64x256xf32>
    %c0_25 = arith.constant 0 : index
    %c0_26 = arith.constant 0 : index
    %c0_27 = arith.constant 0 : index
    %c0_28 = arith.constant 0 : index
    %56 = vector.load %arg2[%c0_25, %c0_26, %c0_27, %c0_28] : memref<2x2x64x256xf32, #tpu.memory_space<vmem>>, vector<1x2x64x256xf32>
    %57 = vector.shape_cast %56 : vector<1x2x64x256xf32> to vector<2x64x256xf32>
    %58 = vector.shape_cast %55 : vector<2x64x256xf32> to vector<1x2x64x256xf32>
    tpu.vector_store %arg2[%c0_25, %c0_26, %c0_27, %c0_28], %58 {strides = array<i32>} : memref<2x2x64x256xf32, #tpu.memory_space<vmem>>, vector<1x2x64x256xf32>,
    %c1_29 = arith.constant 1 : index
    %c0_30 = arith.constant 0 : index
    %c0_31 = arith.constant 0 : index
    %c0_32 = arith.constant 0 : index
    %59 = vector.load %arg1[%c1_29, %c0_30, %c0_31, %c0_32] : memref<2x2x64x256xf32, #tpu.memory_space<vmem>>, vector<1x2x64x256xf32>
    %60 = vector.shape_cast %59 : vector<1x2x64x256xf32> to vector<2x64x256xf32>
    %61 = vector.shape_cast %45 : vector<2x64xf32> to vector<2x64x1xf32>
    %62 = vector.broadcast %61 : vector<2x64x1xf32> to vector<2x64x256xf32>
    %63 = arith.mulf %60, %62 : vector<2x64x256xf32>
    %64 = vector.shape_cast %47 : vector<2x64xf32> to vector<2x64x1xf32>
    %65 = vector.broadcast %64 : vector<2x64x1xf32> to vector<2x64x256xf32>
    %66 = arith.addf %63, %65 : vector<2x64x256xf32>
    %c1_33 = arith.constant 1 : index
    %c0_34 = arith.constant 0 : index
    %c0_35 = arith.constant 0 : index
    %c0_36 = arith.constant 0 : index
    %67 = vector.load %arg2[%c1_33, %c0_34, %c0_35, %c0_36] : memref<2x2x64x256xf32, #tpu.memory_space<vmem>>, vector<1x2x64x256xf32>
    %68 = vector.shape_cast %67 : vector<1x2x64x256xf32> to vector<2x64x256xf32>
    %69 = vector.shape_cast %66 : vector<2x64x256xf32> to vector<1x2x64x256xf32>
    tpu.vector_store %arg2[%c1_33, %c0_34, %c0_35, %c0_36], %69 {strides = array<i32>} : memref<2x2x64x256xf32, #tpu.memory_space<vmem>>, vector<1x2x64x256xf32>,
    return
  }
  func.func @transform_0(%arg0: i32) -> (i32, i32, i32, i32) {
    %c0_i32 = arith.constant 0 : i32
    %c0_i32_0 = arith.constant 0 : i32
    %c0_i32_1 = arith.constant 0 : i32
    %c0_i32_2 = arith.constant 0 : i32
    return %c0_i32, %arg0, %c0_i32_0, %c0_i32_1 : i32, i32, i32, i32
  }
  func.func @transform_1(%arg0: i32) -> (i32, i32, i32, i32) {
    %c0_i32 = arith.constant 0 : i32
    %c0_i32_0 = arith.constant 0 : i32
    %c0_i32_1 = arith.constant 0 : i32
    %c0_i32_2 = arith.constant 0 : i32
    return %c0_i32, %arg0, %c0_i32_0, %c0_i32_1 : i32, i32, i32, i32
  }
}

</mosaic_0001>

<llo_original>
// kernel: tpu_custom_call.1
$region0: #{tpu_custom_call.1}
  #allocation0 [shape = 'u32[]', space=smem, size = 0x4, offset = 0x4, fixed_abs, tag = 'smem constant byte address 0x4 - core index']
  #allocation1 [shape = 'u32[72,128]{1,0:T(1,128)}', space=vmem, size = 0x9000, scoped, tag = 'internal scratch']
  %s0 = inlined_call_operand.hbm [shape: f32[2,2,64,256], index: 0, kind: input, shape index: {}]
  %s1 = inlined_call_operand.hbm [shape: f32[2,2,64,256], index: 1, kind: output, shape index: {}]
  %s2 = sld [smem:[#allocation0]]
  $region18: #{tpu_custom_call.1} parent=0
    _
  %s4 = ssub.s32 1, %s2
  %s5 = scalar_select 0, %s4, %s2
  $region1: #{tpu_custom_call.1} parent=0
    #allocation2 [shape = 'u8[262144]{0}', space=vmem, size = 0x40000, scoped, tag = 'input window, operand 0, single buffered']
    #allocation3 [shape = 's32[1]{0}', space=sflag, size = 0x4, scoped, tag = 'scoped memory for tpu_custom_call.1']
    #allocation4 [shape = 's32[1]{0}', space=sflag, size = 0x4, scoped, tag = 'scoped memory for tpu_custom_call.1']
    #allocation5 [shape = 'u8[262144]{0}', space=vmem, size = 0x40000, scoped, tag = 'output window, operand 0, single buffered']
    %6 = vsyncpa [#allocation3], 0
    %7 = vsyncpa [#allocation4], 0
    // Predicated region
    $region2: #{tpu_custom_call.1} parent=1 // pred_check
      _
    $region3: #{tpu_custom_call.1} parent=1 // pred_check_branch
      %9 = sbr.rel (0) target = $region5
    $region4: #{tpu_custom_call.1} parent=1 // pred_region
      %11 = vsyncadd [#allocation3], 0
      %s12 = sshll.u32 %s0, 4
      %s13 = int_to_ptr.hbm [resolvable:$true] %s12
      %s14 = sshll.u32 [#allocation2], 4
      %s15 = int_to_ptr.vmem [resolvable:$true] %s14
      %20 = dma.hbm_to_vmem [thread:$0]  %s13, 8192, %s15, [#allocation3], 256, 256, 16
    $region5: #{tpu_custom_call.1} parent=1 // pred_fallthru
      _
    // Predicated region
    $region6: #{tpu_custom_call.1} parent=1 // pred_check
      _
    $region7: #{tpu_custom_call.1} parent=1 // pred_check_branch
      %22 = sbr.rel (0) target = $region9
    $region8: #{tpu_custom_call.1} parent=1 // pred_region
      %24 = dma.done [#allocation3], 8192
    $region9: #{tpu_custom_call.1} parent=1 // pred_fallthru
      _
    %v25 = vld [vmem:[#allocation2] sm:$0xff]
    %v26 = vld [vmem:[#allocation2 + $0x8] sm:$0xff]
    %v27 = vld [vmem:[#allocation2 + $0x10] sm:$0xff]
    %v28 = vld [vmem:[#allocation2 + $0x18] sm:$0xff]
    %v29 = vld [vmem:[#allocation2 + $0x20] sm:$0xff]
    %v30 = vld [vmem:[#allocation2 + $0x28] sm:$0xff]
    %v31 = vld [vmem:[#allocation2 + $0x30] sm:$0xff]
    %v32 = vld [vmem:[#allocation2 + $0x38] sm:$0xff]
    %v33 = vld [vmem:[#allocation2 + $0x40] sm:$0xff]
    %v34 = vld [vmem:[#allocation2 + $0x48] sm:$0xff]
    %v35 = vld [vmem:[#allocation2 + $0x50] sm:$0xff]
    %v36 = vld [vmem:[#allocation2 + $0x58] sm:$0xff]
    %v37 = vld [vmem:[#allocation2 + $0x60] sm:$0xff]
    %v38 = vld [vmem:[#allocation2 + $0x68] sm:$0xff]
    %v39 = vld [vmem:[#allocation2 + $0x70] sm:$0xff]
    %v40 = vld [vmem:[#allocation2 + $0x78] sm:$0xff]
    %v41 = vld [vmem:[#allocation2 + $0x80] sm:$0xff]
    %v42 = vld [vmem:[#allocation2 + $0x88] sm:$0xff]
    %v43 = vld [vmem:[#allocation2 + $0x90] sm:$0xff]
    %v44 = vld [vmem:[#allocation2 + $0x98] sm:$0xff]
    %v45 = vld [vmem:[#allocation2 + $0xa0] sm:$0xff]
    %v46 = vld [vmem:[#allocation2 + $0xa8] sm:$0xff]
    %v47 = vld [vmem:[#allocation2 + $0xb0] sm:$0xff]
    %v48 = vld [vmem:[#allocation2 + $0xb8] sm:$0xff]
    %v49 = vld [vmem:[#allocation2 + $0xc0] sm:$0xff]
    %v50 = vld [vmem:[#allocation2 + $0xc8] sm:$0xff]
    %v51 = vld [vmem:[#allocation2 + $0xd0] sm:$0xff]
    %v52 = vld [vmem:[#allocation2 + $0xd8] sm:$0xff]
    %v53 = vld [vmem:[#allocation2 + $0xe0] sm:$0xff]
    %v54 = vld [vmem:[#allocation2 + $0xe8] sm:$0xff]
    %v55 = vld [vmem:[#allocation2 + $0xf0] sm:$0xff]
    %v56 = vld [vmem:[#allocation2 + $0xf8] sm:$0xff]
    %s57 = scalar_lea.vmem [#allocation2], 256
    %v58 = vld [vmem:[%s57] sm:$0xff]
    %v59 = vld [vmem:[%s57 + $0x8] sm:$0xff]
    %v60 = vld [vmem:[%s57 + $0x10] sm:$0xff]
    %v61 = vld [vmem:[%s57 + $0x18] sm:$0xff]
    %v62 = vld [vmem:[%s57 + $0x20] sm:$0xff]
    %v63 = vld [vmem:[%s57 + $0x28] sm:$0xff]
    %v64 = vld [vmem:[%s57 + $0x30] sm:$0xff]
    %v65 = vld [vmem:[%s57 + $0x38] sm:$0xff]
    %v66 = vld [vmem:[%s57 + $0x40] sm:$0xff]
    %v67 = vld [vmem:[%s57 + $0x48] sm:$0xff]
    %v68 = vld [vmem:[%s57 + $0x50] sm:$0xff]
    %v69 = vld [vmem:[%s57 + $0x58] sm:$0xff]
    %v70 = vld [vmem:[%s57 + $0x60] sm:$0xff]
    %v71 = vld [vmem:[%s57 + $0x68] sm:$0xff]
    %v72 = vld [vmem:[%s57 + $0x70] sm:$0xff]
    %v73 = vld [vmem:[%s57 + $0x78] sm:$0xff]
    %v74 = vld [vmem:[%s57 + $0x80] sm:$0xff]
    %v75 = vld [vmem:[%s57 + $0x88] sm:$0xff]
    %v76 = vld [vmem:[%s57 + $0x90] sm:$0xff]
    %v77 = vld [vmem:[%s57 + $0x98] sm:$0xff]
    %v78 = vld [vmem:[%s57 + $0xa0] sm:$0xff]
    %v79 = vld [vmem:[%s57 + $0xa8] sm:$0xff]
    %v80 = vld [vmem:[%s57 + $0xb0] sm:$0xff]
    %v81 = vld [vmem:[%s57 + $0xb8] sm:$0xff]
    %v82 = vld [vmem:[%s57 + $0xc0] sm:$0xff]
    %v83 = vld [vmem:[%s57 + $0xc8] sm:$0xff]
    %v84 = vld [vmem:[%s57 + $0xd0] sm:$0xff]
    %v85 = vld [vmem:[%s57 + $0xd8] sm:$0xff]
    %v86 = vld [vmem:[%s57 + $0xe0] sm:$0xff]
    %v87 = vld [vmem:[%s57 + $0xe8] sm:$0xff]
    %v88 = vld [vmem:[%s57 + $0xf0] sm:$0xff]
    %v89 = vld [vmem:[%s57 + $0xf8] sm:$0xff]
    %v90 = vadd.f32 %v25, %v26
    %91 = vadd.xlane.f32.xlu0 %v90
    %v92 = vpop.xlane.xlu0 %91
    %v93 = vadd.f32 %v27, %v28
    %94 = vadd.xlane.f32.xlu0 %v93
    %v95 = vpop.xlane.xlu0 %94
    %v96 = vadd.f32 %v29, %v30
    %97 = vadd.xlane.f32.xlu0 %v96
    %v98 = vpop.xlane.xlu0 %97
    %v99 = vadd.f32 %v31, %v32
    %100 = vadd.xlane.f32.xlu0 %v99
    %v101 = vpop.xlane.xlu0 %100
    %v102 = vadd.f32 %v33, %v34
    %103 = vadd.xlane.f32.xlu0 %v102
    %v104 = vpop.xlane.xlu0 %103
    %v105 = vadd.f32 %v35, %v36
    %106 = vadd.xlane.f32.xlu0 %v105
    %v107 = vpop.xlane.xlu0 %106
    %v108 = vadd.f32 %v37, %v38
    %109 = vadd.xlane.f32.xlu0 %v108
    %v110 = vpop.xlane.xlu0 %109
    %v111 = vadd.f32 %v39, %v40
    %112 = vadd.xlane.f32.xlu0 %v111
    %v113 = vpop.xlane.xlu0 %112
    %v114 = vadd.f32 %v41, %v42
    %115 = vadd.xlane.f32.xlu0 %v114
    %v116 = vpop.xlane.xlu0 %115
    %v117 = vadd.f32 %v43, %v44
    %118 = vadd.xlane.f32.xlu0 %v117
    %v119 = vpop.xlane.xlu0 %118
    %v120 = vadd.f32 %v45, %v46
    %121 = vadd.xlane.f32.xlu0 %v120
    %v122 = vpop.xlane.xlu0 %121
    %v123 = vadd.f32 %v47, %v48
    %124 = vadd.xlane.f32.xlu0 %v123
    %v125 = vpop.xlane.xlu0 %124
    %v126 = vadd.f32 %v49, %v50
    %127 = vadd.xlane.f32.xlu0 %v126
    %v128 = vpop.xlane.xlu0 %127
    %v129 = vadd.f32 %v51, %v52
    %130 = vadd.xlane.f32.xlu0 %v129
    %v131 = vpop.xlane.xlu0 %130
    %v132 = vadd.f32 %v53, %v54
    %133 = vadd.xlane.f32.xlu0 %v132
    %v134 = vpop.xlane.xlu0 %133
    %v135 = vadd.f32 %v55, %v56
    %136 = vadd.xlane.f32.xlu0 %v135
    %v137 = vpop.xlane.xlu0 %136
    %v138 = vmul.f32 %v25, %v25
    %v139 = vmul.f32 %v26, %v26
    %v140 = vmul.f32 %v27, %v27
    %v141 = vmul.f32 %v28, %v28
    %v142 = vmul.f32 %v29, %v29
    %v143 = vmul.f32 %v30, %v30
    %v144 = vmul.f32 %v31, %v31
    %v145 = vmul.f32 %v32, %v32
    %v146 = vmul.f32 %v33, %v33
    %v147 = vmul.f32 %v34, %v34
    %v148 = vmul.f32 %v35, %v35
    %v149 = vmul.f32 %v36, %v36
    %v150 = vmul.f32 %v37, %v37
    %v151 = vmul.f32 %v38, %v38
    %v152 = vmul.f32 %v39, %v39
    %v153 = vmul.f32 %v40, %v40
    %v154 = vmul.f32 %v41, %v41
    %v155 = vmul.f32 %v42, %v42
    %v156 = vmul.f32 %v43, %v43
    %v157 = vmul.f32 %v44, %v44
    %v158 = vmul.f32 %v45, %v45
    %v159 = vmul.f32 %v46, %v46
    %v160 = vmul.f32 %v47, %v47
    %v161 = vmul.f32 %v48, %v48
    %v162 = vmul.f32 %v49, %v49
    %v163 = vmul.f32 %v50, %v50
    %v164 = vmul.f32 %v51, %v51
    %v165 = vmul.f32 %v52, %v52
    %v166 = vmul.f32 %v53, %v53
    %v167 = vmul.f32 %v54, %v54
    %v168 = vmul.f32 %v55, %v55
    %v169 = vmul.f32 %v56, %v56
    %v170 = vadd.f32 %v138, %v139
    %171 = vadd.xlane.f32.xlu0 %v170
    %v172 = vpop.xlane.xlu0 %171
    %v173 = vadd.f32 %v140, %v141
    %174 = vadd.xlane.f32.xlu0 %v173
    %v175 = vpop.xlane.xlu0 %174
    %v176 = vadd.f32 %v142, %v143
    %177 = vadd.xlane.f32.xlu0 %v176
    %v178 = vpop.xlane.xlu0 %177
    %v179 = vadd.f32 %v144, %v145
    %180 = vadd.xlane.f32.xlu0 %v179
    %v181 = vpop.xlane.xlu0 %180
    %v182 = vadd.f32 %v146, %v147
    %183 = vadd.xlane.f32.xlu0 %v182
    %v184 = vpop.xlane.xlu0 %183
    %v185 = vadd.f32 %v148, %v149
    %186 = vadd.xlane.f32.xlu0 %v185
    %v187 = vpop.xlane.xlu0 %186
    %v188 = vadd.f32 %v150, %v151
    %189 = vadd.xlane.f32.xlu0 %v188
    %v190 = vpop.xlane.xlu0 %189
    %v191 = vadd.f32 %v152, %v153
    %192 = vadd.xlane.f32.xlu0 %v191
    %v193 = vpop.xlane.xlu0 %192
    %v194 = vadd.f32 %v154, %v155
    %195 = vadd.xlane.f32.xlu0 %v194
    %v196 = vpop.xlane.xlu0 %195
    %v197 = vadd.f32 %v156, %v157
    %198 = vadd.xlane.f32.xlu0 %v197
    %v199 = vpop.xlane.xlu0 %198
    %v200 = vadd.f32 %v158, %v159
    %201 = vadd.xlane.f32.xlu0 %v200
    %v202 = vpop.xlane.xlu0 %201
    %v203 = vadd.f32 %v160, %v161
    %204 = vadd.xlane.f32.xlu0 %v203
    %v205 = vpop.xlane.xlu0 %204
    %v206 = vadd.f32 %v162, %v163
    %207 = vadd.xlane.f32.xlu0 %v206
    %v208 = vpop.xlane.xlu0 %207
    %v209 = vadd.f32 %v164, %v165
    %210 = vadd.xlane.f32.xlu0 %v209
    %v211 = vpop.xlane.xlu0 %210
    %v212 = vadd.f32 %v166, %v167
    %213 = vadd.xlane.f32.xlu0 %v212
    %v214 = vpop.xlane.xlu0 %213
    %v215 = vadd.f32 %v168, %v169
    %216 = vadd.xlane.f32.xlu0 %v215
    %v217 = vpop.xlane.xlu0 %216
    %v218 = vmul.f32 %v92, 0.00390625
    %v219 = vmul.f32 %v95, 0.00390625
    %v220 = vmul.f32 %v98, 0.00390625
    %v221 = vmul.f32 %v101, 0.00390625
    %v222 = vmul.f32 %v104, 0.00390625
    %v223 = vmul.f32 %v107, 0.00390625
    %v224 = vmul.f32 %v110, 0.00390625
    %v225 = vmul.f32 %v113, 0.00390625
    %v226 = vmul.f32 %v116, 0.00390625
    %v227 = vmul.f32 %v119, 0.00390625
    %v228 = vmul.f32 %v122, 0.00390625
    %v229 = vmul.f32 %v125, 0.00390625
    %v230 = vmul.f32 %v128, 0.00390625
    %v231 = vmul.f32 %v131, 0.00390625
    %v232 = vmul.f32 %v134, 0.00390625
    %v233 = vmul.f32 %v137, 0.00390625
    %v234 = vmul.f32 %v92, %v92
    %v235 = vmul.f32 %v95, %v95
    %v236 = vmul.f32 %v98, %v98
    %v237 = vmul.f32 %v101, %v101
    %v238 = vmul.f32 %v104, %v104
    %v239 = vmul.f32 %v107, %v107
    %v240 = vmul.f32 %v110, %v110
    %v241 = vmul.f32 %v113, %v113
    %v242 = vmul.f32 %v116, %v116
    %v243 = vmul.f32 %v119, %v119
    %v244 = vmul.f32 %v122, %v122
    %v245 = vmul.f32 %v125, %v125
    %v246 = vmul.f32 %v128, %v128
    %v247 = vmul.f32 %v131, %v131
    %v248 = vmul.f32 %v134, %v134
    %v249 = vmul.f32 %v137, %v137
    %v250 = vmul.f32 %v234, 0.00390625
    %v251 = vmul.f32 %v235, 0.00390625
    %v252 = vmul.f32 %v236, 0.00390625
    %v253 = vmul.f32 %v237, 0.00390625
    %v254 = vmul.f32 %v238, 0.00390625
    %v255 = vmul.f32 %v239, 0.00390625
    %v256 = vmul.f32 %v240, 0.00390625
    %v257 = vmul.f32 %v241, 0.00390625
    %v258 = vmul.f32 %v242, 0.00390625
    %v259 = vmul.f32 %v243, 0.00390625
    %v260 = vmul.f32 %v244, 0.00390625
    %v261 = vmul.f32 %v245, 0.00390625
    %v262 = vmul.f32 %v246, 0.00390625
    %v263 = vmul.f32 %v247, 0.00390625
    %v264 = vmul.f32 %v248, 0.00390625
    %v265 = vmul.f32 %v249, 0.00390625
    %v266 = vsub.f32 %v172, %v250
    %v267 = vsub.f32 %v175, %v251
    %v268 = vsub.f32 %v178, %v252
    %v269 = vsub.f32 %v181, %v253
    %v270 = vsub.f32 %v184, %v254
    %v271 = vsub.f32 %v187, %v255
    %v272 = vsub.f32 %v190, %v256
    %v273 = vsub.f32 %v193, %v257
    %v274 = vsub.f32 %v196, %v258
    %v275 = vsub.f32 %v199, %v259
    %v276 = vsub.f32 %v202, %v260
    %v277 = vsub.f32 %v205, %v261
    %v278 = vsub.f32 %v208, %v262
    %v279 = vsub.f32 %v211, %v263
    %v280 = vsub.f32 %v214, %v264
    %v281 = vsub.f32 %v217, %v265
    %v282 = vmul.f32 %v266, 0.003921569
    %v283 = vmul.f32 %v267, 0.003921569
    %v284 = vmul.f32 %v268, 0.003921569
    %v285 = vmul.f32 %v269, 0.003921569
    %v286 = vmul.f32 %v270, 0.003921569
    %v287 = vmul.f32 %v271, 0.003921569
    %v288 = vmul.f32 %v272, 0.003921569
    %v289 = vmul.f32 %v273, 0.003921569
    %v290 = vmul.f32 %v274, 0.003921569
    %v291 = vmul.f32 %v275, 0.003921569
    %v292 = vmul.f32 %v276, 0.003921569
    %v293 = vmul.f32 %v277, 0.003921569
    %v294 = vmul.f32 %v278, 0.003921569
    %v295 = vmul.f32 %v279, 0.003921569
    %v296 = vmul.f32 %v280, 0.003921569
    %v297 = vmul.f32 %v281, 0.003921569
    %v298 = vmax.f32 %v282, 0.0
    %v299 = vmax.f32 %v283, 0.0
    %v300 = vmax.f32 %v284, 0.0
    %v301 = vmax.f32 %v285, 0.0
    %v302 = vmax.f32 %v286, 0.0
    %v303 = vmax.f32 %v287, 0.0
    %v304 = vmax.f32 %v288, 0.0
    %v305 = vmax.f32 %v289, 0.0
    %v306 = vmax.f32 %v290, 0.0
    %v307 = vmax.f32 %v291, 0.0
    %v308 = vmax.f32 %v292, 0.0
    %v309 = vmax.f32 %v293, 0.0
    %v310 = vmax.f32 %v294, 0.0
    %v311 = vmax.f32 %v295, 0.0
    %v312 = vmax.f32 %v296, 0.0
    %v313 = vmax.f32 %v297, 0.0
    %v314 = vadd.f32 %v58, %v59
    %315 = vadd.xlane.f32.xlu0 %v314
    %v316 = vpop.xlane.xlu0 %315
    %v317 = vadd.f32 %v60, %v61
    %318 = vadd.xlane.f32.xlu0 %v317
    %v319 = vpop.xlane.xlu0 %318
    %v320 = vadd.f32 %v62, %v63
    %321 = vadd.xlane.f32.xlu0 %v320
    %v322 = vpop.xlane.xlu0 %321
    %v323 = vadd.f32 %v64, %v65
    %324 = vadd.xlane.f32.xlu0 %v323
    %v325 = vpop.xlane.xlu0 %324
    %v326 = vadd.f32 %v66, %v67
    %327 = vadd.xlane.f32.xlu0 %v326
    %v328 = vpop.xlane.xlu0 %327
    %v329 = vadd.f32 %v68, %v69
    %330 = vadd.xlane.f32.xlu0 %v329
    %v331 = vpop.xlane.xlu0 %330
    %v332 = vadd.f32 %v70, %v71
    %333 = vadd.xlane.f32.xlu0 %v332
    %v334 = vpop.xlane.xlu0 %333
    %v335 = vadd.f32 %v72, %v73
    %336 = vadd.xlane.f32.xlu0 %v335
    %v337 = vpop.xlane.xlu0 %336
    %v338 = vadd.f32 %v74, %v75
    %339 = vadd.xlane.f32.xlu0 %v338
    %v340 = vpop.xlane.xlu0 %339
    %v341 = vadd.f32 %v76, %v77
    %342 = vadd.xlane.f32.xlu0 %v341
    %v343 = vpop.xlane.xlu0 %342
    %v344 = vadd.f32 %v78, %v79
    %345 = vadd.xlane.f32.xlu0 %v344
    %v346 = vpop.xlane.xlu0 %345
    %v347 = vadd.f32 %v80, %v81
    %348 = vadd.xlane.f32.xlu0 %v347
    %v349 = vpop.xlane.xlu0 %348
    %v350 = vadd.f32 %v82, %v83
    %351 = vadd.xlane.f32.xlu0 %v350
    %v352 = vpop.xlane.xlu0 %351
    %v353 = vadd.f32 %v84, %v85
    %354 = vadd.xlane.f32.xlu0 %v353
    %v355 = vpop.xlane.xlu0 %354
    %v356 = vadd.f32 %v86, %v87
    %357 = vadd.xlane.f32.xlu0 %v356
    %v358 = vpop.xlane.xlu0 %357
    %v359 = vadd.f32 %v88, %v89
    %360 = vadd.xlane.f32.xlu0 %v359
    %v361 = vpop.xlane.xlu0 %360
    %v362 = vmul.f32 %v58, %v58
    %v363 = vmul.f32 %v59, %v59
    %v364 = vmul.f32 %v60, %v60
    %v365 = vmul.f32 %v61, %v61
    %v366 = vmul.f32 %v62, %v62
    %v367 = vmul.f32 %v63, %v63
    %v368 = vmul.f32 %v64, %v64
    %v369 = vmul.f32 %v65, %v65
    %v370 = vmul.f32 %v66, %v66
    %v371 = vmul.f32 %v67, %v67
    %v372 = vmul.f32 %v68, %v68
    %v373 = vmul.f32 %v69, %v69
    %v374 = vmul.f32 %v70, %v70
    %v375 = vmul.f32 %v71, %v71
    %v376 = vmul.f32 %v72, %v72
    %v377 = vmul.f32 %v73, %v73
    %v378 = vmul.f32 %v74, %v74
    %v379 = vmul.f32 %v75, %v75
    %v380 = vmul.f32 %v76, %v76
    %v381 = vmul.f32 %v77, %v77
    %v382 = vmul.f32 %v78, %v78
    %v383 = vmul.f32 %v79, %v79
    %v384 = vmul.f32 %v80, %v80
    %v385 = vmul.f32 %v81, %v81
    %v386 = vmul.f32 %v82, %v82
    %v387 = vmul.f32 %v83, %v83
    %v388 = vmul.f32 %v84, %v84
    %v389 = vmul.f32 %v85, %v85
    %v390 = vmul.f32 %v86, %v86
    %v391 = vmul.f32 %v87, %v87
    %v392 = vmul.f32 %v88, %v88
    %v393 = vmul.f32 %v89, %v89
    %v394 = vadd.f32 %v362, %v363
    %395 = vadd.xlane.f32.xlu0 %v394
    %v396 = vpop.xlane.xlu0 %395
    %v397 = vadd.f32 %v364, %v365
    %398 = vadd.xlane.f32.xlu0 %v397
    %v399 = vpop.xlane.xlu0 %398
    %v400 = vadd.f32 %v366, %v367
    %401 = vadd.xlane.f32.xlu0 %v400
    %v402 = vpop.xlane.xlu0 %401
    %v403 = vadd.f32 %v368, %v369
    %404 = vadd.xlane.f32.xlu0 %v403
    %v405 = vpop.xlane.xlu0 %404
    %v406 = vadd.f32 %v370, %v371
    %407 = vadd.xlane.f32.xlu0 %v406
    %v408 = vpop.xlane.xlu0 %407
    %v409 = vadd.f32 %v372, %v373
    %410 = vadd.xlane.f32.xlu0 %v409
    %v411 = vpop.xlane.xlu0 %410
    %v412 = vadd.f32 %v374, %v375
    %413 = vadd.xlane.f32.xlu0 %v412
    %v414 = vpop.xlane.xlu0 %413
    %v415 = vadd.f32 %v376, %v377
    %416 = vadd.xlane.f32.xlu0 %v415
    %v417 = vpop.xlane.xlu0 %416
    %v418 = vadd.f32 %v378, %v379
    %419 = vadd.xlane.f32.xlu0 %v418
    %v420 = vpop.xlane.xlu0 %419
    %v421 = vadd.f32 %v380, %v381
    %422 = vadd.xlane.f32.xlu0 %v421
    %v423 = vpop.xlane.xlu0 %422
    %v424 = vadd.f32 %v382, %v383
    %425 = vadd.xlane.f32.xlu0 %v424
    %v426 = vpop.xlane.xlu0 %425
    %v427 = vadd.f32 %v384, %v385
    %428 = vadd.xlane.f32.xlu0 %v427
    %v429 = vpop.xlane.xlu0 %428
    %v430 = vadd.f32 %v386, %v387
    %431 = vadd.xlane.f32.xlu0 %v430
    %v432 = vpop.xlane.xlu0 %431
    %v433 = vadd.f32 %v388, %v389
    %434 = vadd.xlane.f32.xlu0 %v433
    %v435 = vpop.xlane.xlu0 %434
    %v436 = vadd.f32 %v390, %v391
    %437 = vadd.xlane.f32.xlu0 %v436
    %v438 = vpop.xlane.xlu0 %437
    %v439 = vadd.f32 %v392, %v393
    %440 = vadd.xlane.f32.xlu0 %v439
    %v441 = vpop.xlane.xlu0 %440
    %v442 = vmul.f32 %v316, 0.00390625
    %v443 = vmul.f32 %v319, 0.00390625
    %v444 = vmul.f32 %v322, 0.00390625
    %v445 = vmul.f32 %v325, 0.00390625
    %v446 = vmul.f32 %v328, 0.00390625
    %v447 = vmul.f32 %v331, 0.00390625
    %v448 = vmul.f32 %v334, 0.00390625
    %v449 = vmul.f32 %v337, 0.00390625
    %v450 = vmul.f32 %v340, 0.00390625
    %v451 = vmul.f32 %v343, 0.00390625
    %v452 = vmul.f32 %v346, 0.00390625
    %v453 = vmul.f32 %v349, 0.00390625
    %v454 = vmul.f32 %v352, 0.00390625
    %v455 = vmul.f32 %v355, 0.00390625
    %v456 = vmul.f32 %v358, 0.00390625
    %v457 = vmul.f32 %v361, 0.00390625
    %v458 = vmul.f32 %v316, %v316
    %v459 = vmul.f32 %v319, %v319
    %v460 = vmul.f32 %v322, %v322
    %v461 = vmul.f32 %v325, %v325
    %v462 = vmul.f32 %v328, %v328
    %v463 = vmul.f32 %v331, %v331
    %v464 = vmul.f32 %v334, %v334
    %v465 = vmul.f32 %v337, %v337
    %v466 = vmul.f32 %v340, %v340
    %v467 = vmul.f32 %v343, %v343
    %v468 = vmul.f32 %v346, %v346
    %v469 = vmul.f32 %v349, %v349
    %v470 = vmul.f32 %v352, %v352
    %v471 = vmul.f32 %v355, %v355
    %v472 = vmul.f32 %v358, %v358
    %v473 = vmul.f32 %v361, %v361
    %v474 = vmul.f32 %v458, 0.00390625
    %v475 = vmul.f32 %v459, 0.00390625
    %v476 = vmul.f32 %v460, 0.00390625
    %v477 = vmul.f32 %v461, 0.00390625
    %v478 = vmul.f32 %v462, 0.00390625
    %v479 = vmul.f32 %v463, 0.00390625
    %v480 = vmul.f32 %v464, 0.00390625
    %v481 = vmul.f32 %v465, 0.00390625
    %v482 = vmul.f32 %v466, 0.00390625
    %v483 = vmul.f32 %v467, 0.00390625
    %v484 = vmul.f32 %v468, 0.00390625
    %v485 = vmul.f32 %v469, 0.00390625
    %v486 = vmul.f32 %v470, 0.00390625
    %v487 = vmul.f32 %v471, 0.00390625
    %v488 = vmul.f32 %v472, 0.00390625
    %v489 = vmul.f32 %v473, 0.00390625
    %v490 = vsub.f32 %v396, %v474
    %v491 = vsub.f32 %v399, %v475
    %v492 = vsub.f32 %v402, %v476
    %v493 = vsub.f32 %v405, %v477
    %v494 = vsub.f32 %v408, %v478
    %v495 = vsub.f32 %v411, %v479
    %v496 = vsub.f32 %v414, %v480
    %v497 = vsub.f32 %v417, %v481
    %v498 = vsub.f32 %v420, %v482
    %v499 = vsub.f32 %v423, %v483
    %v500 = vsub.f32 %v426, %v484
    %v501 = vsub.f32 %v429, %v485
    %v502 = vsub.f32 %v432, %v486
    %v503 = vsub.f32 %v435, %v487
    %v504 = vsub.f32 %v438, %v488
    %v505 = vsub.f32 %v441, %v489
    %v506 = vmul.f32 %v490, 0.003921569
    %v507 = vmul.f32 %v491, 0.003921569
    %v508 = vmul.f32 %v492, 0.003921569
    %v509 = vmul.f32 %v493, 0.003921569
    %v510 = vmul.f32 %v494, 0.003921569
    %v511 = vmul.f32 %v495, 0.003921569
    %v512 = vmul.f32 %v496, 0.003921569
    %v513 = vmul.f32 %v497, 0.003921569
    %v514 = vmul.f32 %v498, 0.003921569
    %v515 = vmul.f32 %v499, 0.003921569
    %v516 = vmul.f32 %v500, 0.003921569
    %v517 = vmul.f32 %v501, 0.003921569
    %v518 = vmul.f32 %v502, 0.003921569
    %v519 = vmul.f32 %v503, 0.003921569
    %v520 = vmul.f32 %v504, 0.003921569
    %v521 = vmul.f32 %v505, 0.003921569
    %v522 = vmax.f32 %v506, 0.0
    %v523 = vmax.f32 %v507, 0.0
    %v524 = vmax.f32 %v508, 0.0
    %v525 = vmax.f32 %v509, 0.0
    %v526 = vmax.f32 %v510, 0.0
    %v527 = vmax.f32 %v511, 0.0
    %v528 = vmax.f32 %v512, 0.0
    %v529 = vmax.f32 %v513, 0.0
    %v530 = vmax.f32 %v514, 0.0
    %v531 = vmax.f32 %v515, 0.0
    %v532 = vmax.f32 %v516, 0.0
    %v533 = vmax.f32 %v517, 0.0
    %v534 = vmax.f32 %v518, 0.0
    %v535 = vmax.f32 %v519, 0.0
    %v536 = vmax.f32 %v520, 0.0
    %v537 = vmax.f32 %v521, 0.0
    %v538 = vadd.f32 %v298, 1e-05
    %v539 = vadd.f32 %v299, 1e-05
    %v540 = vadd.f32 %v300, 1e-05
    %v541 = vadd.f32 %v301, 1e-05
    %v542 = vadd.f32 %v302, 1e-05
    %v543 = vadd.f32 %v303, 1e-05
    %v544 = vadd.f32 %v304, 1e-05
    %v545 = vadd.f32 %v305, 1e-05
    %v546 = vadd.f32 %v306, 1e-05
    %v547 = vadd.f32 %v307, 1e-05
    %v548 = vadd.f32 %v308, 1e-05
    %v549 = vadd.f32 %v309, 1e-05
    %v550 = vadd.f32 %v310, 1e-05
    %v551 = vadd.f32 %v311, 1e-05
    %v552 = vadd.f32 %v312, 1e-05
    %v553 = vadd.f32 %v313, 1e-05
    %v554 = vrsqrt.pop %v538
    %v555 = vmul.f32 %v554, %v538
    %v556 = vmul.f32 %v555, %v554
    %v557 = vmul.f32 0.5, %v556
    %v558 = vsub.f32 1.5, %v557
    %v559 = vmul.f32 %v554, %v558
    %v560 = vmul.f32 %v538, %v559
    %vm561 = vcmp.eq.f32.partialorder %v538, inf
    %v562 = vsel %vm561, %v538, %v560
    %vm563 = vcmp.eq.f32.partialorder %v538, 0.0
    %v564 = vand.u32 %v538, 2147483648
    %v565 = vsel %vm563, %v564, %v562
    %v566 = vrsqrt.pop %v539
    %v567 = vmul.f32 %v566, %v539
    %v568 = vmul.f32 %v567, %v566
    %v569 = vmul.f32 0.5, %v568
    %v570 = vsub.f32 1.5, %v569
    %v571 = vmul.f32 %v566, %v570
    %v572 = vmul.f32 %v539, %v571
    %vm573 = vcmp.eq.f32.partialorder %v539, inf
    %v574 = vsel %vm573, %v539, %v572
    %vm575 = vcmp.eq.f32.partialorder %v539, 0.0
    %v576 = vand.u32 %v539, 2147483648
    %v577 = vsel %vm575, %v576, %v574
    %v578 = vrsqrt.pop %v540
    %v579 = vmul.f32 %v578, %v540
    %v580 = vmul.f32 %v579, %v578
    %v581 = vmul.f32 0.5, %v580
    %v582 = vsub.f32 1.5, %v581
    %v583 = vmul.f32 %v578, %v582
    %v584 = vmul.f32 %v540, %v583
    %vm585 = vcmp.eq.f32.partialorder %v540, inf
    %v586 = vsel %vm585, %v540, %v584
    %vm587 = vcmp.eq.f32.partialorder %v540, 0.0
    %v588 = vand.u32 %v540, 2147483648
    %v589 = vsel %vm587, %v588, %v586
    %v590 = vrsqrt.pop %v541
    %v591 = vmul.f32 %v590, %v541
    %v592 = vmul.f32 %v591, %v590
    %v593 = vmul.f32 0.5, %v592
    %v594 = vsub.f32 1.5, %v593
    %v595 = vmul.f32 %v590, %v594
    %v596 = vmul.f32 %v541, %v595
    %vm597 = vcmp.eq.f32.partialorder %v541, inf
    %v598 = vsel %vm597, %v541, %v596
    %vm599 = vcmp.eq.f32.partialorder %v541, 0.0
    %v600 = vand.u32 %v541, 2147483648
    %v601 = vsel %vm599, %v600, %v598
    %v602 = vrsqrt.pop %v542
    %v603 = vmul.f32 %v602, %v542
    %v604 = vmul.f32 %v603, %v602
    %v605 = vmul.f32 0.5, %v604
    %v606 = vsub.f32 1.5, %v605
    %v607 = vmul.f32 %v602, %v606
    %v608 = vmul.f32 %v542, %v607
    %vm609 = vcmp.eq.f32.partialorder %v542, inf
    %v610 = vsel %vm609, %v542, %v608
    %vm611 = vcmp.eq.f32.partialorder %v542, 0.0
    %v612 = vand.u32 %v542, 2147483648
    %v613 = vsel %vm611, %v612, %v610
    %v614 = vrsqrt.pop %v543
    %v615 = vmul.f32 %v614, %v543
    %v616 = vmul.f32 %v615, %v614
    %v617 = vmul.f32 0.5, %v616
    %v618 = vsub.f32 1.5, %v617
    %v619 = vmul.f32 %v614, %v618
    %v620 = vmul.f32 %v543, %v619
    %vm621 = vcmp.eq.f32.partialorder %v543, inf
    %v622 = vsel %vm621, %v543, %v620
    %vm623 = vcmp.eq.f32.partialorder %v543, 0.0
    %v624 = vand.u32 %v543, 2147483648
    %v625 = vsel %vm623, %v624, %v622
    %v626 = vrsqrt.pop %v544
    %v627 = vmul.f32 %v626, %v544
    %v628 = vmul.f32 %v627, %v626
    %v629 = vmul.f32 0.5, %v628
    %v630 = vsub.f32 1.5, %v629
    %v631 = vmul.f32 %v626, %v630
    %v632 = vmul.f32 %v544, %v631
    %vm633 = vcmp.eq.f32.partialorder %v544, inf
    %v634 = vsel %vm633, %v544, %v632
    %vm635 = vcmp.eq.f32.partialorder %v544, 0.0
    %v636 = vand.u32 %v544, 2147483648
    %v637 = vsel %vm635, %v636, %v634
    %v638 = vrsqrt.pop %v545
    %v639 = vmul.f32 %v638, %v545
    %v640 = vmul.f32 %v639, %v638
    %v641 = vmul.f32 0.5, %v640
    %v642 = vsub.f32 1.5, %v641
    %v643 = vmul.f32 %v638, %v642
    %v644 = vmul.f32 %v545, %v643
    %vm645 = vcmp.eq.f32.partialorder %v545, inf
    %v646 = vsel %vm645, %v545, %v644
    %vm647 = vcmp.eq.f32.partialorder %v545, 0.0
    %v648 = vand.u32 %v545, 2147483648
    %v649 = vsel %vm647, %v648, %v646
    %v650 = vrsqrt.pop %v546
    %v651 = vmul.f32 %v650, %v546
    %v652 = vmul.f32 %v651, %v650
    %v653 = vmul.f32 0.5, %v652
    %v654 = vsub.f32 1.5, %v653
    %v655 = vmul.f32 %v650, %v654
    %v656 = vmul.f32 %v546, %v655
    %vm657 = vcmp.eq.f32.partialorder %v546, inf
    %v658 = vsel %vm657, %v546, %v656
    %vm659 = vcmp.eq.f32.partialorder %v546, 0.0
    %v660 = vand.u32 %v546, 2147483648
    %v661 = vsel %vm659, %v660, %v658
    %v662 = vrsqrt.pop %v547
    %v663 = vmul.f32 %v662, %v547
    %v664 = vmul.f32 %v663, %v662
    %v665 = vmul.f32 0.5, %v664
    %v666 = vsub.f32 1.5, %v665
    %v667 = vmul.f32 %v662, %v666
    %v668 = vmul.f32 %v547, %v667
    %vm669 = vcmp.eq.f32.partialorder %v547, inf
    %v670 = vsel %vm669, %v547, %v668
    %vm671 = vcmp.eq.f32.partialorder %v547, 0.0
    %v672 = vand.u32 %v547, 2147483648
    %v673 = vsel %vm671, %v672, %v670
    %v674 = vrsqrt.pop %v548
    %v675 = vmul.f32 %v674, %v548
    %v676 = vmul.f32 %v675, %v674
    %v677 = vmul.f32 0.5, %v676
    %v678 = vsub.f32 1.5, %v677
    %v679 = vmul.f32 %v674, %v678
    %v680 = vmul.f32 %v548, %v679
    %vm681 = vcmp.eq.f32.partialorder %v548, inf
    %v682 = vsel %vm681, %v548, %v680
    %vm683 = vcmp.eq.f32.partialorder %v548, 0.0
    %v684 = vand.u32 %v548, 2147483648
    %v685 = vsel %vm683, %v684, %v682
    %v686 = vrsqrt.pop %v549
    %v687 = vmul.f32 %v686, %v549
    %v688 = vmul.f32 %v687, %v686
    %v689 = vmul.f32 0.5, %v688
    %v690 = vsub.f32 1.5, %v689
    %v691 = vmul.f32 %v686, %v690
    %v692 = vmul.f32 %v549, %v691
    %vm693 = vcmp.eq.f32.partialorder %v549, inf
    %v694 = vsel %vm693, %v549, %v692
    %vm695 = vcmp.eq.f32.partialorder %v549, 0.0
    %v696 = vand.u32 %v549, 2147483648
    %v697 = vsel %vm695, %v696, %v694
    %v698 = vrsqrt.pop %v550
    %v699 = vmul.f32 %v698, %v550
    %v700 = vmul.f32 %v699, %v698
    %v701 = vmul.f32 0.5, %v700
    %v702 = vsub.f32 1.5, %v701
    %v703 = vmul.f32 %v698, %v702
    %v704 = vmul.f32 %v550, %v703
    %vm705 = vcmp.eq.f32.partialorder %v550, inf
    %v706 = vsel %vm705, %v550, %v704
    %vm707 = vcmp.eq.f32.partialorder %v550, 0.0
    %v708 = vand.u32 %v550, 2147483648
    %v709 = vsel %vm707, %v708, %v706
    %v710 = vrsqrt.pop %v551
    %v711 = vmul.f32 %v710, %v551
    %v712 = vmul.f32 %v711, %v710
    %v713 = vmul.f32 0.5, %v712
    %v714 = vsub.f32 1.5, %v713
    %v715 = vmul.f32 %v710, %v714
    %v716 = vmul.f32 %v551, %v715
    %vm717 = vcmp.eq.f32.partialorder %v551, inf
    %v718 = vsel %vm717, %v551, %v716
    %vm719 = vcmp.eq.f32.partialorder %v551, 0.0
    %v720 = vand.u32 %v551, 2147483648
    %v721 = vsel %vm719, %v720, %v718
    %v722 = vrsqrt.pop %v552
    %v723 = vmul.f32 %v722, %v552
    %v724 = vmul.f32 %v723, %v722
    %v725 = vmul.f32 0.5, %v724
    %v726 = vsub.f32 1.5, %v725
    %v727 = vmul.f32 %v722, %v726
    %v728 = vmul.f32 %v552, %v727
    %vm729 = vcmp.eq.f32.partialorder %v552, inf
    %v730 = vsel %vm729, %v552, %v728
    %vm731 = vcmp.eq.f32.partialorder %v552, 0.0
    %v732 = vand.u32 %v552, 2147483648
    %v733 = vsel %vm731, %v732, %v730
    %v734 = vrsqrt.pop %v553
    %v735 = vmul.f32 %v734, %v553
    %v736 = vmul.f32 %v735, %v734
    %v737 = vmul.f32 0.5, %v736
    %v738 = vsub.f32 1.5, %v737
    %v739 = vmul.f32 %v734, %v738
    %v740 = vmul.f32 %v553, %v739
    %vm741 = vcmp.eq.f32.partialorder %v553, inf
    %v742 = vsel %vm741, %v553, %v740
    %vm743 = vcmp.eq.f32.partialorder %v553, 0.0
    %v744 = vand.u32 %v553, 2147483648
    %v745 = vsel %vm743, %v744, %v742
    %v746 = vadd.f32 %v522, 1e-05
    %v747 = vadd.f32 %v523, 1e-05
    %v748 = vadd.f32 %v524, 1e-05
    %v749 = vadd.f32 %v525, 1e-05
    %v750 = vadd.f32 %v526, 1e-05
    %v751 = vadd.f32 %v527, 1e-05
    %v752 = vadd.f32 %v528, 1e-05
    %v753 = vadd.f32 %v529, 1e-05
    %v754 = vadd.f32 %v530, 1e-05
    %v755 = vadd.f32 %v531, 1e-05
    %v756 = vadd.f32 %v532, 1e-05
    %v757 = vadd.f32 %v533, 1e-05
    %v758 = vadd.f32 %v534, 1e-05
    %v759 = vadd.f32 %v535, 1e-05
    %v760 = vadd.f32 %v536, 1e-05
    %v761 = vadd.f32 %v537, 1e-05
    %v762 = vrsqrt.pop %v746
    %v763 = vmul.f32 %v762, %v746
    %v764 = vmul.f32 %v763, %v762
    %v765 = vmul.f32 0.5, %v764
    %v766 = vsub.f32 1.5, %v765
    %v767 = vmul.f32 %v762, %v766
    %v768 = vmul.f32 %v746, %v767
    %vm769 = vcmp.eq.f32.partialorder %v746, inf
    %v770 = vsel %vm769, %v746, %v768
    %vm771 = vcmp.eq.f32.partialorder %v746, 0.0
    %v772 = vand.u32 %v746, 2147483648
    %v773 = vsel %vm771, %v772, %v770
    %v774 = vrsqrt.pop %v747
    %v775 = vmul.f32 %v774, %v747
    %v776 = vmul.f32 %v775, %v774
    %v777 = vmul.f32 0.5, %v776
    %v778 = vsub.f32 1.5, %v777
    %v779 = vmul.f32 %v774, %v778
    %v780 = vmul.f32 %v747, %v779
    %vm781 = vcmp.eq.f32.partialorder %v747, inf
    %v782 = vsel %vm781, %v747, %v780
    %vm783 = vcmp.eq.f32.partialorder %v747, 0.0
    %v784 = vand.u32 %v747, 2147483648
    %v785 = vsel %vm783, %v784, %v782
    %v786 = vrsqrt.pop %v748
    %v787 = vmul.f32 %v786, %v748
    %v788 = vmul.f32 %v787, %v786
    %v789 = vmul.f32 0.5, %v788
    %v790 = vsub.f32 1.5, %v789
    %v791 = vmul.f32 %v786, %v790
    %v792 = vmul.f32 %v748, %v791
    %vm793 = vcmp.eq.f32.partialorder %v748, inf
    %v794 = vsel %vm793, %v748, %v792
    %vm795 = vcmp.eq.f32.partialorder %v748, 0.0
    %v796 = vand.u32 %v748, 2147483648
    %v797 = vsel %vm795, %v796, %v794
    %v798 = vrsqrt.pop %v749
    %v799 = vmul.f32 %v798, %v749
    %v800 = vmul.f32 %v799, %v798
    %v801 = vmul.f32 0.5, %v800
    %v802 = vsub.f32 1.5, %v801
    %v803 = vmul.f32 %v798, %v802
    %v804 = vmul.f32 %v749, %v803
    %vm805 = vcmp.eq.f32.partialorder %v749, inf
    %v806 = vsel %vm805, %v749, %v804
    %vm807 = vcmp.eq.f32.partialorder %v749, 0.0
    %v808 = vand.u32 %v749, 2147483648
    %v809 = vsel %vm807, %v808, %v806
    %v810 = vrsqrt.pop %v750
    %v811 = vmul.f32 %v810, %v750
    %v812 = vmul.f32 %v811, %v810
    %v813 = vmul.f32 0.5, %v812
    %v814 = vsub.f32 1.5, %v813
    %v815 = vmul.f32 %v810, %v814
    %v816 = vmul.f32 %v750, %v815
    %vm817 = vcmp.eq.f32.partialorder %v750, inf
    %v818 = vsel %vm817, %v750, %v816
    %vm819 = vcmp.eq.f32.partialorder %v750, 0.0
    %v820 = vand.u32 %v750, 2147483648
    %v821 = vsel %vm819, %v820, %v818
    %v822 = vrsqrt.pop %v751
    %v823 = vmul.f32 %v822, %v751
    %v824 = vmul.f32 %v823, %v822
    %v825 = vmul.f32 0.5, %v824
    %v826 = vsub.f32 1.5, %v825
    %v827 = vmul.f32 %v822, %v826
    %v828 = vmul.f32 %v751, %v827
    %vm829 = vcmp.eq.f32.partialorder %v751, inf
    %v830 = vsel %vm829, %v751, %v828
    %vm831 = vcmp.eq.f32.partialorder %v751, 0.0
    %v832 = vand.u32 %v751, 2147483648
    %v833 = vsel %vm831, %v832, %v830
    %v834 = vrsqrt.pop %v752
    %v835 = vmul.f32 %v834, %v752
    %v836 = vmul.f32 %v835, %v834
    %v837 = vmul.f32 0.5, %v836
    %v838 = vsub.f32 1.5, %v837
    %v839 = vmul.f32 %v834, %v838
    %v840 = vmul.f32 %v752, %v839
    %vm841 = vcmp.eq.f32.partialorder %v752, inf
    %v842 = vsel %vm841, %v752, %v840
    %vm843 = vcmp.eq.f32.partialorder %v752, 0.0
    %v844 = vand.u32 %v752, 2147483648
    %v845 = vsel %vm843, %v844, %v842
    %v846 = vrsqrt.pop %v753
    %v847 = vmul.f32 %v846, %v753
    %v848 = vmul.f32 %v847, %v846
    %v849 = vmul.f32 0.5, %v848
    %v850 = vsub.f32 1.5, %v849
    %v851 = vmul.f32 %v846, %v850
    %v852 = vmul.f32 %v753, %v851
    %vm853 = vcmp.eq.f32.partialorder %v753, inf
    %v854 = vsel %vm853, %v753, %v852
    %vm855 = vcmp.eq.f32.partialorder %v753, 0.0
    %v856 = vand.u32 %v753, 2147483648
    %v857 = vsel %vm855, %v856, %v854
    %v858 = vrsqrt.pop %v754
    %v859 = vmul.f32 %v858, %v754
    %v860 = vmul.f32 %v859, %v858
    %v861 = vmul.f32 0.5, %v860
    %v862 = vsub.f32 1.5, %v861
    %v863 = vmul.f32 %v858, %v862
    %v864 = vmul.f32 %v754, %v863
    %vm865 = vcmp.eq.f32.partialorder %v754, inf
    %v866 = vsel %vm865, %v754, %v864
    %vm867 = vcmp.eq.f32.partialorder %v754, 0.0
    %v868 = vand.u32 %v754, 2147483648
    %v869 = vsel %vm867, %v868, %v866
    %v870 = vrsqrt.pop %v755
    %v871 = vmul.f32 %v870, %v755
    %v872 = vmul.f32 %v871, %v870
    %v873 = vmul.f32 0.5, %v872
    %v874 = vsub.f32 1.5, %v873
    %v875 = vmul.f32 %v870, %v874
    %v876 = vmul.f32 %v755, %v875
    %vm877 = vcmp.eq.f32.partialorder %v755, inf
    %v878 = vsel %vm877, %v755, %v876
    %vm879 = vcmp.eq.f32.partialorder %v755, 0.0
    %v880 = vand.u32 %v755, 2147483648
    %v881 = vsel %vm879, %v880, %v878
    %v882 = vrsqrt.pop %v756
    %v883 = vmul.f32 %v882, %v756
    %v884 = vmul.f32 %v883, %v882
    %v885 = vmul.f32 0.5, %v884
    %v886 = vsub.f32 1.5, %v885
    %v887 = vmul.f32 %v882, %v886
    %v888 = vmul.f32 %v756, %v887
    %vm889 = vcmp.eq.f32.partialorder %v756, inf
    %v890 = vsel %vm889, %v756, %v888
    %vm891 = vcmp.eq.f32.partialorder %v756, 0.0
    %v892 = vand.u32 %v756, 2147483648
    %v893 = vsel %vm891, %v892, %v890
    %v894 = vrsqrt.pop %v757
    %v895 = vmul.f32 %v894, %v757
    %v896 = vmul.f32 %v895, %v894
    %v897 = vmul.f32 0.5, %v896
    %v898 = vsub.f32 1.5, %v897
    %v899 = vmul.f32 %v894, %v898
    %v900 = vmul.f32 %v757, %v899
    %vm901 = vcmp.eq.f32.partialorder %v757, inf
    %v902 = vsel %vm901, %v757, %v900
    %vm903 = vcmp.eq.f32.partialorder %v757, 0.0
    %v904 = vand.u32 %v757, 2147483648
    %v905 = vsel %vm903, %v904, %v902
    %v906 = vrsqrt.pop %v758
    %v907 = vmul.f32 %v906, %v758
    %v908 = vmul.f32 %v907, %v906
    %v909 = vmul.f32 0.5, %v908
    %v910 = vsub.f32 1.5, %v909
    %v911 = vmul.f32 %v906, %v910
    %v912 = vmul.f32 %v758, %v911
    %vm913 = vcmp.eq.f32.partialorder %v758, inf
    %v914 = vsel %vm913, %v758, %v912
    %vm915 = vcmp.eq.f32.partialorder %v758, 0.0
    %v916 = vand.u32 %v758, 2147483648
    %v917 = vsel %vm915, %v916, %v914
    %v918 = vrsqrt.pop %v759
    %v919 = vmul.f32 %v918, %v759
    %v920 = vmul.f32 %v919, %v918
    %v921 = vmul.f32 0.5, %v920
    %v922 = vsub.f32 1.5, %v921
    %v923 = vmul.f32 %v918, %v922
    %v924 = vmul.f32 %v759, %v923
    %vm925 = vcmp.eq.f32.partialorder %v759, inf
    %v926 = vsel %vm925, %v759, %v924
    %vm927 = vcmp.eq.f32.partialorder %v759, 0.0
    %v928 = vand.u32 %v759, 2147483648
    %v929 = vsel %vm927, %v928, %v926
    %v930 = vrsqrt.pop %v760
    %v931 = vmul.f32 %v930, %v760
    %v932 = vmul.f32 %v931, %v930
    %v933 = vmul.f32 0.5, %v932
    %v934 = vsub.f32 1.5, %v933
    %v935 = vmul.f32 %v930, %v934
    %v936 = vmul.f32 %v760, %v935
    %vm937 = vcmp.eq.f32.partialorder %v760, inf
    %v938 = vsel %vm937, %v760, %v936
    %vm939 = vcmp.eq.f32.partialorder %v760, 0.0
    %v940 = vand.u32 %v760, 2147483648
    %v941 = vsel %vm939, %v940, %v938
    %v942 = vrsqrt.pop %v761
    %v943 = vmul.f32 %v942, %v761
    %v944 = vmul.f32 %v943, %v942
    %v945 = vmul.f32 0.5, %v944
    %v946 = vsub.f32 1.5, %v945
    %v947 = vmul.f32 %v942, %v946
    %v948 = vmul.f32 %v761, %v947
    %vm949 = vcmp.eq.f32.partialorder %v761, inf
    %v950 = vsel %vm949, %v761, %v948
    %vm951 = vcmp.eq.f32.partialorder %v761, 0.0
    %v952 = vand.u32 %v761, 2147483648
    %v953 = vsel %vm951, %v952, %v950
    %v954 = vrsqrt.pop %v538
    %v955 = vmul.f32 %v954, %v538
    %v956 = vmul.f32 %v955, %v954
    %v957 = vmul.f32 0.5, %v956
    %v958 = vsub.f32 1.5, %v957
    %v959 = vmul.f32 %v954, %v958
    %vm960 = vweird.f32 %v538
    %vm961 = vweird.f32 %v954
    %vm962 = vmor %vm960, %vm961
    %v963 = vsel %vm962, %v954, %v959
    %v964 = vrsqrt.pop %v539
    %v965 = vmul.f32 %v964, %v539
    %v966 = vmul.f32 %v965, %v964
    %v967 = vmul.f32 0.5, %v966
    %v968 = vsub.f32 1.5, %v967
    %v969 = vmul.f32 %v964, %v968
    %vm970 = vweird.f32 %v539
    %vm971 = vweird.f32 %v964
    %vm972 = vmor %vm970, %vm971
    %v973 = vsel %vm972, %v964, %v969
    %v974 = vrsqrt.pop %v540
    %v975 = vmul.f32 %v974, %v540
    %v976 = vmul.f32 %v975, %v974
    %v977 = vmul.f32 0.5, %v976
    %v978 = vsub.f32 1.5, %v977
    %v979 = vmul.f32 %v974, %v978
    %vm980 = vweird.f32 %v540
    %vm981 = vweird.f32 %v974
    %vm982 = vmor %vm980, %vm981
    %v983 = vsel %vm982, %v974, %v979
    %v984 = vrsqrt.pop %v541
    %v985 = vmul.f32 %v984, %v541
    %v986 = vmul.f32 %v985, %v984
    %v987 = vmul.f32 0.5, %v986
    %v988 = vsub.f32 1.5, %v987
    %v989 = vmul.f32 %v984, %v988
    %vm990 = vweird.f32 %v541
    %vm991 = vweird.f32 %v984
    %vm992 = vmor %vm990, %vm991
    %v993 = vsel %vm992, %v984, %v989
    %v994 = vrsqrt.pop %v542
    %v995 = vmul.f32 %v994, %v542
    %v996 = vmul.f32 %v995, %v994
    %v997 = vmul.f32 0.5, %v996
    %v998 = vsub.f32 1.5, %v997
    %v999 = vmul.f32 %v994, %v998
    %vm1000 = vweird.f32 %v542
    %vm1001 = vweird.f32 %v994
    %vm1002 = vmor %vm1000, %vm1001
    %v1003 = vsel %vm1002, %v994, %v999
    %v1004 = vrsqrt.pop %v543
    %v1005 = vmul.f32 %v1004, %v543
    %v1006 = vmul.f32 %v1005, %v1004
    %v1007 = vmul.f32 0.5, %v1006
    %v1008 = vsub.f32 1.5, %v1007
    %v1009 = vmul.f32 %v1004, %v1008
    %vm1010 = vweird.f32 %v543
    %vm1011 = vweird.f32 %v1004
    %vm1012 = vmor %vm1010, %vm1011
    %v1013 = vsel %vm1012, %v1004, %v1009
    %v1014 = vrsqrt.pop %v544
    %v1015 = vmul.f32 %v1014, %v544
    %v1016 = vmul.f32 %v1015, %v1014
    %v1017 = vmul.f32 0.5, %v1016
    %v1018 = vsub.f32 1.5, %v1017
    %v1019 = vmul.f32 %v1014, %v1018
    %vm1020 = vweird.f32 %v544
    %vm1021 = vweird.f32 %v1014
    %vm1022 = vmor %vm1020, %vm1021
    %v1023 = vsel %vm1022, %v1014, %v1019
    %v1024 = vrsqrt.pop %v545
    %v1025 = vmul.f32 %v1024, %v545
    %v1026 = vmul.f32 %v1025, %v1024
    %v1027 = vmul.f32 0.5, %v1026
    %v1028 = vsub.f32 1.5, %v1027
    %v1029 = vmul.f32 %v1024, %v1028
    %vm1030 = vweird.f32 %v545
    %vm1031 = vweird.f32 %v1024
    %vm1032 = vmor %vm1030, %vm1031
    %v1033 = vsel %vm1032, %v1024, %v1029
    %v1034 = vrsqrt.pop %v546
    %v1035 = vmul.f32 %v1034, %v546
    %v1036 = vmul.f32 %v1035, %v1034
    %v1037 = vmul.f32 0.5, %v1036
    %v1038 = vsub.f32 1.5, %v1037
    %v1039 = vmul.f32 %v1034, %v1038
    %vm1040 = vweird.f32 %v546
    %vm1041 = vweird.f32 %v1034
    %vm1042 = vmor %vm1040, %vm1041
    %v1043 = vsel %vm1042, %v1034, %v1039
    %v1044 = vrsqrt.pop %v547
    %v1045 = vmul.f32 %v1044, %v547
    %v1046 = vmul.f32 %v1045, %v1044
    %v1047 = vmul.f32 0.5, %v1046
    %v1048 = vsub.f32 1.5, %v1047
    %v1049 = vmul.f32 %v1044, %v1048
    %vm1050 = vweird.f32 %v547
    %vm1051 = vweird.f32 %v1044
    %vm1052 = vmor %vm1050, %vm1051
    %v1053 = vsel %vm1052, %v1044, %v1049
    %v1054 = vrsqrt.pop %v548
    %v1055 = vmul.f32 %v1054, %v548
    %v1056 = vmul.f32 %v1055, %v1054
    %v1057 = vmul.f32 0.5, %v1056
    %v1058 = vsub.f32 1.5, %v1057
    %v1059 = vmul.f32 %v1054, %v1058
    %vm1060 = vweird.f32 %v548
    %vm1061 = vweird.f32 %v1054
    %vm1062 = vmor %vm1060, %vm1061
    %v1063 = vsel %vm1062, %v1054, %v1059
    %v1064 = vrsqrt.pop %v549
    %v1065 = vmul.f32 %v1064, %v549
    %v1066 = vmul.f32 %v1065, %v1064
    %v1067 = vmul.f32 0.5, %v1066
    %v1068 = vsub.f32 1.5, %v1067
    %v1069 = vmul.f32 %v1064, %v1068
    %vm1070 = vweird.f32 %v549
    %vm1071 = vweird.f32 %v1064
    %vm1072 = vmor %vm1070, %vm1071
    %v1073 = vsel %vm1072, %v1064, %v1069
    %v1074 = vrsqrt.pop %v550
    %v1075 = vmul.f32 %v1074, %v550
    %v1076 = vmul.f32 %v1075, %v1074
    %v1077 = vmul.f32 0.5, %v1076
    %v1078 = vsub.f32 1.5, %v1077
    %v1079 = vmul.f32 %v1074, %v1078
    %vm1080 = vweird.f32 %v550
    %vm1081 = vweird.f32 %v1074
    %vm1082 = vmor %vm1080, %vm1081
    %v1083 = vsel %vm1082, %v1074, %v1079
    %v1084 = vrsqrt.pop %v551
    %v1085 = vmul.f32 %v1084, %v551
    %v1086 = vmul.f32 %v1085, %v1084
    %v1087 = vmul.f32 0.5, %v1086
    %v1088 = vsub.f32 1.5, %v1087
    %v1089 = vmul.f32 %v1084, %v1088
    %vm1090 = vweird.f32 %v551
    %vm1091 = vweird.f32 %v1084
    %vm1092 = vmor %vm1090, %vm1091
    %v1093 = vsel %vm1092, %v1084, %v1089
    %v1094 = vrsqrt.pop %v552
    %v1095 = vmul.f32 %v1094, %v552
    %v1096 = vmul.f32 %v1095, %v1094
    %v1097 = vmul.f32 0.5, %v1096
    %v1098 = vsub.f32 1.5, %v1097
    %v1099 = vmul.f32 %v1094, %v1098
    %vm1100 = vweird.f32 %v552
    %vm1101 = vweird.f32 %v1094
    %vm1102 = vmor %vm1100, %vm1101
    %v1103 = vsel %vm1102, %v1094, %v1099
    %v1104 = vrsqrt.pop %v553
    %v1105 = vmul.f32 %v1104, %v553
    %v1106 = vmul.f32 %v1105, %v1104
    %v1107 = vmul.f32 0.5, %v1106
    %v1108 = vsub.f32 1.5, %v1107
    %v1109 = vmul.f32 %v1104, %v1108
    %vm1110 = vweird.f32 %v553
    %vm1111 = vweird.f32 %v1104
    %vm1112 = vmor %vm1110, %vm1111
    %v1113 = vsel %vm1112, %v1104, %v1109
    %v1114 = vrsqrt.pop %v746
    %v1115 = vmul.f32 %v1114, %v746
    %v1116 = vmul.f32 %v1115, %v1114
    %v1117 = vmul.f32 0.5, %v1116
    %v1118 = vsub.f32 1.5, %v1117
    %v1119 = vmul.f32 %v1114, %v1118
    %vm1120 = vweird.f32 %v746
    %vm1121 = vweird.f32 %v1114
    %vm1122 = vmor %vm1120, %vm1121
    %v1123 = vsel %vm1122, %v1114, %v1119
    %v1124 = vrsqrt.pop %v747
    %v1125 = vmul.f32 %v1124, %v747
    %v1126 = vmul.f32 %v1125, %v1124
    %v1127 = vmul.f32 0.5, %v1126
    %v1128 = vsub.f32 1.5, %v1127
    %v1129 = vmul.f32 %v1124, %v1128
    %vm1130 = vweird.f32 %v747
    %vm1131 = vweird.f32 %v1124
    %vm1132 = vmor %vm1130, %vm1131
    %v1133 = vsel %vm1132, %v1124, %v1129
    %v1134 = vrsqrt.pop %v748
    %v1135 = vmul.f32 %v1134, %v748
    %v1136 = vmul.f32 %v1135, %v1134
    %v1137 = vmul.f32 0.5, %v1136
    %v1138 = vsub.f32 1.5, %v1137
    %v1139 = vmul.f32 %v1134, %v1138
    %vm1140 = vweird.f32 %v748
    %vm1141 = vweird.f32 %v1134
    %vm1142 = vmor %vm1140, %vm1141
    %v1143 = vsel %vm1142, %v1134, %v1139
    %v1144 = vrsqrt.pop %v749
    %v1145 = vmul.f32 %v1144, %v749
    %v1146 = vmul.f32 %v1145, %v1144
    %v1147 = vmul.f32 0.5, %v1146
    %v1148 = vsub.f32 1.5, %v1147
    %v1149 = vmul.f32 %v1144, %v1148
    %vm1150 = vweird.f32 %v749
    %vm1151 = vweird.f32 %v1144
    %vm1152 = vmor %vm1150, %vm1151
    %v1153 = vsel %vm1152, %v1144, %v1149
    %v1154 = vrsqrt.pop %v750
    %v1155 = vmul.f32 %v1154, %v750
    %v1156 = vmul.f32 %v1155, %v1154
    %v1157 = vmul.f32 0.5, %v1156
    %v1158 = vsub.f32 1.5, %v1157
    %v1159 = vmul.f32 %v1154, %v1158
    %vm1160 = vweird.f32 %v750
    %vm1161 = vweird.f32 %v1154
    %vm1162 = vmor %vm1160, %vm1161
    %v1163 = vsel %vm1162, %v1154, %v1159
    %v1164 = vrsqrt.pop %v751
    %v1165 = vmul.f32 %v1164, %v751
    %v1166 = vmul.f32 %v1165, %v1164
    %v1167 = vmul.f32 0.5, %v1166
    %v1168 = vsub.f32 1.5, %v1167
    %v1169 = vmul.f32 %v1164, %v1168
    %vm1170 = vweird.f32 %v751
    %vm1171 = vweird.f32 %v1164
    %vm1172 = vmor %vm1170, %vm1171
    %v1173 = vsel %vm1172, %v1164, %v1169
    %v1174 = vrsqrt.pop %v752
    %v1175 = vmul.f32 %v1174, %v752
    %v1176 = vmul.f32 %v1175, %v1174
    %v1177 = vmul.f32 0.5, %v1176
    %v1178 = vsub.f32 1.5, %v1177
    %v1179 = vmul.f32 %v1174, %v1178
    %vm1180 = vweird.f32 %v752
    %vm1181 = vweird.f32 %v1174
    %vm1182 = vmor %vm1180, %vm1181
    %v1183 = vsel %vm1182, %v1174, %v1179
    %v1184 = vrsqrt.pop %v753
    %v1185 = vmul.f32 %v1184, %v753
    %v1186 = vmul.f32 %v1185, %v1184
    %v1187 = vmul.f32 0.5, %v1186
    %v1188 = vsub.f32 1.5, %v1187
    %v1189 = vmul.f32 %v1184, %v1188
    %vm1190 = vweird.f32 %v753
    %vm1191 = vweird.f32 %v1184
    %vm1192 = vmor %vm1190, %vm1191
    %v1193 = vsel %vm1192, %v1184, %v1189
    %v1194 = vrsqrt.pop %v754
    %v1195 = vmul.f32 %v1194, %v754
    %v1196 = vmul.f32 %v1195, %v1194
    %v1197 = vmul.f32 0.5, %v1196
    %v1198 = vsub.f32 1.5, %v1197
    %v1199 = vmul.f32 %v1194, %v1198
    %vm1200 = vweird.f32 %v754
    %vm1201 = vweird.f32 %v1194
    %vm1202 = vmor %vm1200, %vm1201
    %v1203 = vsel %vm1202, %v1194, %v1199
    %v1204 = vrsqrt.pop %v755
    %v1205 = vmul.f32 %v1204, %v755
    %v1206 = vmul.f32 %v1205, %v1204
    %v1207 = vmul.f32 0.5, %v1206
    %v1208 = vsub.f32 1.5, %v1207
    %v1209 = vmul.f32 %v1204, %v1208
    %vm1210 = vweird.f32 %v755
    %vm1211 = vweird.f32 %v1204
    %vm1212 = vmor %vm1210, %vm1211
    %v1213 = vsel %vm1212, %v1204, %v1209
    %v1214 = vrsqrt.pop %v756
    %v1215 = vmul.f32 %v1214, %v756
    %v1216 = vmul.f32 %v1215, %v1214
    %v1217 = vmul.f32 0.5, %v1216
    %v1218 = vsub.f32 1.5, %v1217
    %v1219 = vmul.f32 %v1214, %v1218
    %vm1220 = vweird.f32 %v756
    %vm1221 = vweird.f32 %v1214
    %vm1222 = vmor %vm1220, %vm1221
    %v1223 = vsel %vm1222, %v1214, %v1219
    %v1224 = vrsqrt.pop %v757
    %v1225 = vmul.f32 %v1224, %v757
    %v1226 = vmul.f32 %v1225, %v1224
    %v1227 = vmul.f32 0.5, %v1226
    %v1228 = vsub.f32 1.5, %v1227
    %v1229 = vmul.f32 %v1224, %v1228
    %vm1230 = vweird.f32 %v757
    %vm1231 = vweird.f32 %v1224
    %vm1232 = vmor %vm1230, %vm1231
    %v1233 = vsel %vm1232, %v1224, %v1229
    %v1234 = vrsqrt.pop %v758
    %v1235 = vmul.f32 %v1234, %v758
    %v1236 = vmul.f32 %v1235, %v1234
    %v1237 = vmul.f32 0.5, %v1236
    %v1238 = vsub.f32 1.5, %v1237
    %v1239 = vmul.f32 %v1234, %v1238
    %vm1240 = vweird.f32 %v758
    %vm1241 = vweird.f32 %v1234
    %vm1242 = vmor %vm1240, %vm1241
    %v1243 = vsel %vm1242, %v1234, %v1239
    %v1244 = vrsqrt.pop %v759
    %v1245 = vmul.f32 %v1244, %v759
    %v1246 = vmul.f32 %v1245, %v1244
    %v1247 = vmul.f32 0.5, %v1246
    %v1248 = vsub.f32 1.5, %v1247
    %v1249 = vmul.f32 %v1244, %v1248
    %vm1250 = vweird.f32 %v759
    %vm1251 = vweird.f32 %v1244
    %vm1252 = vmor %vm1250, %vm1251
    %v1253 = vsel %vm1252, %v1244, %v1249
    %v1254 = vrsqrt.pop %v760
    %v1255 = vmul.f32 %v1254, %v760
    %v1256 = vmul.f32 %v1255, %v1254
    %v1257 = vmul.f32 0.5, %v1256
    %v1258 = vsub.f32 1.5, %v1257
    %v1259 = vmul.f32 %v1254, %v1258
    %vm1260 = vweird.f32 %v760
    %vm1261 = vweird.f32 %v1254
    %vm1262 = vmor %vm1260, %vm1261
    %v1263 = vsel %vm1262, %v1254, %v1259
    %v1264 = vrsqrt.pop %v761
    %v1265 = vmul.f32 %v1264, %v761
    %v1266 = vmul.f32 %v1265, %v1264
    %v1267 = vmul.f32 0.5, %v1266
    %v1268 = vsub.f32 1.5, %v1267
    %v1269 = vmul.f32 %v1264, %v1268
    %vm1270 = vweird.f32 %v761
    %vm1271 = vweird.f32 %v1264
    %vm1272 = vmor %vm1270, %vm1271
    %v1273 = vsel %vm1272, %v1264, %v1269
    %v1274 = vmul.f32 %v773, %v963
    %v1275 = vmul.f32 %v785, %v973
    %v1276 = vmul.f32 %v797, %v983
    %v1277 = vmul.f32 %v809, %v993
    %v1278 = vmul.f32 %v821, %v1003
    %v1279 = vmul.f32 %v833, %v1013
    %v1280 = vmul.f32 %v845, %v1023
    %v1281 = vmul.f32 %v857, %v1033
    %v1282 = vmul.f32 %v869, %v1043
    %v1283 = vmul.f32 %v881, %v1053
    %v1284 = vmul.f32 %v893, %v1063
    %v1285 = vmul.f32 %v905, %v1073
    %v1286 = vmul.f32 %v917, %v1083
    %v1287 = vmul.f32 %v929, %v1093
    %v1288 = vmul.f32 %v941, %v1103
    %v1289 = vmul.f32 %v953, %v1113
    %v1290 = vmul.f32 %v218, %v1274
    %v1291 = vmul.f32 %v219, %v1275
    %v1292 = vmul.f32 %v220, %v1276
    %v1293 = vmul.f32 %v221, %v1277
    %v1294 = vmul.f32 %v222, %v1278
    %v1295 = vmul.f32 %v223, %v1279
    %v1296 = vmul.f32 %v224, %v1280
    %v1297 = vmul.f32 %v225, %v1281
    %v1298 = vmul.f32 %v226, %v1282
    %v1299 = vmul.f32 %v227, %v1283
    %v1300 = vmul.f32 %v228, %v1284
    %v1301 = vmul.f32 %v229, %v1285
    %v1302 = vmul.f32 %v230, %v1286
    %v1303 = vmul.f32 %v231, %v1287
    %v1304 = vmul.f32 %v232, %v1288
    %v1305 = vmul.f32 %v233, %v1289
    %v1306 = vsub.f32 %v442, %v1290
    %v1307 = vsub.f32 %v443, %v1291
    %v1308 = vsub.f32 %v444, %v1292
    %v1309 = vsub.f32 %v445, %v1293
    %v1310 = vsub.f32 %v446, %v1294
    %v1311 = vsub.f32 %v447, %v1295
    %v1312 = vsub.f32 %v448, %v1296
    %v1313 = vsub.f32 %v449, %v1297
    %v1314 = vsub.f32 %v450, %v1298
    %v1315 = vsub.f32 %v451, %v1299
    %v1316 = vsub.f32 %v452, %v1300
    %v1317 = vsub.f32 %v453, %v1301
    %v1318 = vsub.f32 %v454, %v1302
    %v1319 = vsub.f32 %v455, %v1303
    %v1320 = vsub.f32 %v456, %v1304
    %v1321 = vsub.f32 %v457, %v1305
    %v1322 = vmul.f32 %v565, %v1123
    %v1323 = vmul.f32 %v577, %v1133
    %v1324 = vmul.f32 %v589, %v1143
    %v1325 = vmul.f32 %v601, %v1153
    %v1326 = vmul.f32 %v613, %v1163
    %v1327 = vmul.f32 %v625, %v1173
    %v1328 = vmul.f32 %v637, %v1183
    %v1329 = vmul.f32 %v649, %v1193
    %v1330 = vmul.f32 %v661, %v1203
    %v1331 = vmul.f32 %v673, %v1213
    %v1332 = vmul.f32 %v685, %v1223
    %v1333 = vmul.f32 %v697, %v1233
    %v1334 = vmul.f32 %v709, %v1243
    %v1335 = vmul.f32 %v721, %v1253
    %v1336 = vmul.f32 %v733, %v1263
    %v1337 = vmul.f32 %v745, %v1273
    %v1338 = vmul.f32 %v442, %v1322
    %v1339 = vmul.f32 %v443, %v1323
    %v1340 = vmul.f32 %v444, %v1324
    %v1341 = vmul.f32 %v445, %v1325
    %v1342 = vmul.f32 %v446, %v1326
    %v1343 = vmul.f32 %v447, %v1327
    %v1344 = vmul.f32 %v448, %v1328
    %v1345 = vmul.f32 %v449, %v1329
    %v1346 = vmul.f32 %v450, %v1330
    %v1347 = vmul.f32 %v451, %v1331
    %v1348 = vmul.f32 %v452, %v1332
    %v1349 = vmul.f32 %v453, %v1333
    %v1350 = vmul.f32 %v454, %v1334
    %v1351 = vmul.f32 %v455, %v1335
    %v1352 = vmul.f32 %v456, %v1336
    %v1353 = vmul.f32 %v457, %v1337
    %v1354 = vsub.f32 %v218, %v1338
    %v1355 = vsub.f32 %v219, %v1339
    %v1356 = vsub.f32 %v220, %v1340
    %v1357 = vsub.f32 %v221, %v1341
    %v1358 = vsub.f32 %v222, %v1342
    %v1359 = vsub.f32 %v223, %v1343
    %v1360 = vsub.f32 %v224, %v1344
    %v1361 = vsub.f32 %v225, %v1345
    %v1362 = vsub.f32 %v226, %v1346
    %v1363 = vsub.f32 %v227, %v1347
    %v1364 = vsub.f32 %v228, %v1348
    %v1365 = vsub.f32 %v229, %v1349
    %v1366 = vsub.f32 %v230, %v1350
    %v1367 = vsub.f32 %v231, %v1351
    %v1368 = vsub.f32 %v232, %v1352
    %v1369 = vsub.f32 %v233, %v1353
    %v1370 = vmul.f32 %v25, %v1274
    %v1371 = vmul.f32 %v26, %v1274
    %v1372 = vmul.f32 %v27, %v1275
    %v1373 = vmul.f32 %v28, %v1275
    %v1374 = vmul.f32 %v29, %v1276
    %v1375 = vmul.f32 %v30, %v1276
    %v1376 = vmul.f32 %v31, %v1277
    %v1377 = vmul.f32 %v32, %v1277
    %v1378 = vmul.f32 %v33, %v1278
    %v1379 = vmul.f32 %v34, %v1278
    %v1380 = vmul.f32 %v35, %v1279
    %v1381 = vmul.f32 %v36, %v1279
    %v1382 = vmul.f32 %v37, %v1280
    %v1383 = vmul.f32 %v38, %v1280
    %v1384 = vmul.f32 %v39, %v1281
    %v1385 = vmul.f32 %v40, %v1281
    %v1386 = vmul.f32 %v41, %v1282
    %v1387 = vmul.f32 %v42, %v1282
    %v1388 = vmul.f32 %v43, %v1283
    %v1389 = vmul.f32 %v44, %v1283
    %v1390 = vmul.f32 %v45, %v1284
    %v1391 = vmul.f32 %v46, %v1284
    %v1392 = vmul.f32 %v47, %v1285
    %v1393 = vmul.f32 %v48, %v1285
    %v1394 = vmul.f32 %v49, %v1286
    %v1395 = vmul.f32 %v50, %v1286
    %v1396 = vmul.f32 %v51, %v1287
    %v1397 = vmul.f32 %v52, %v1287
    %v1398 = vmul.f32 %v53, %v1288
    %v1399 = vmul.f32 %v54, %v1288
    %v1400 = vmul.f32 %v55, %v1289
    %v1401 = vmul.f32 %v56, %v1289
    %v1402 = vadd.f32 %v1370, %v1306
    %v1403 = vadd.f32 %v1371, %v1306
    %v1404 = vadd.f32 %v1372, %v1307
    %v1405 = vadd.f32 %v1373, %v1307
    %v1406 = vadd.f32 %v1374, %v1308
    %v1407 = vadd.f32 %v1375, %v1308
    %v1408 = vadd.f32 %v1376, %v1309
    %v1409 = vadd.f32 %v1377, %v1309
    %v1410 = vadd.f32 %v1378, %v1310
    %v1411 = vadd.f32 %v1379, %v1310
    %v1412 = vadd.f32 %v1380, %v1311
    %v1413 = vadd.f32 %v1381, %v1311
    %v1414 = vadd.f32 %v1382, %v1312
    %v1415 = vadd.f32 %v1383, %v1312
    %v1416 = vadd.f32 %v1384, %v1313
    %v1417 = vadd.f32 %v1385, %v1313
    %v1418 = vadd.f32 %v1386, %v1314
    %v1419 = vadd.f32 %v1387, %v1314
    %v1420 = vadd.f32 %v1388, %v1315
    %v1421 = vadd.f32 %v1389, %v1315
    %v1422 = vadd.f32 %v1390, %v1316
    %v1423 = vadd.f32 %v1391, %v1316
    %v1424 = vadd.f32 %v1392, %v1317
    %v1425 = vadd.f32 %v1393, %v1317
    %v1426 = vadd.f32 %v1394, %v1318
    %v1427 = vadd.f32 %v1395, %v1318
    %v1428 = vadd.f32 %v1396, %v1319
    %v1429 = vadd.f32 %v1397, %v1319
    %v1430 = vadd.f32 %v1398, %v1320
    %v1431 = vadd.f32 %v1399, %v1320
    %v1432 = vadd.f32 %v1400, %v1321
    %v1433 = vadd.f32 %v1401, %v1321
    %1434 = vst [vmem:[#allocation5] sm:$0xff] %v1402
    %1435 = vst [vmem:[#allocation5 + $0x8] sm:$0xff] %v1403
    %1436 = vst [vmem:[#allocation5 + $0x10] sm:$0xff] %v1404
    %1437 = vst [vmem:[#allocation5 + $0x18] sm:$0xff] %v1405
    %1438 = vst [vmem:[#allocation5 + $0x20] sm:$0xff] %v1406
    %1439 = vst [vmem:[#allocation5 + $0x28] sm:$0xff] %v1407
    %1440 = vst [vmem:[#allocation5 + $0x30] sm:$0xff] %v1408
    %1441 = vst [vmem:[#allocation5 + $0x38] sm:$0xff] %v1409
    %1442 = vst [vmem:[#allocation5 + $0x40] sm:$0xff] %v1410
    %1443 = vst [vmem:[#allocation5 + $0x48] sm:$0xff] %v1411
    %1444 = vst [vmem:[#allocation5 + $0x50] sm:$0xff] %v1412
    %1445 = vst [vmem:[#allocation5 + $0x58] sm:$0xff] %v1413
    %1446 = vst [vmem:[#allocation5 + $0x60] sm:$0xff] %v1414
    %1447 = vst [vmem:[#allocation5 + $0x68] sm:$0xff] %v1415
    %1448 = vst [vmem:[#allocation5 + $0x70] sm:$0xff] %v1416
    %1449 = vst [vmem:[#allocation5 + $0x78] sm:$0xff] %v1417
    %1450 = vst [vmem:[#allocation5 + $0x80] sm:$0xff] %v1418
    %1451 = vst [vmem:[#allocation5 + $0x88] sm:$0xff] %v1419
    %1452 = vst [vmem:[#allocation5 + $0x90] sm:$0xff] %v1420
    %1453 = vst [vmem:[#allocation5 + $0x98] sm:$0xff] %v1421
    %1454 = vst [vmem:[#allocation5 + $0xa0] sm:$0xff] %v1422
    %1455 = vst [vmem:[#allocation5 + $0xa8] sm:$0xff] %v1423
    %1456 = vst [vmem:[#allocation5 + $0xb0] sm:$0xff] %v1424
    %1457 = vst [vmem:[#allocation5 + $0xb8] sm:$0xff] %v1425
    %1458 = vst [vmem:[#allocation5 + $0xc0] sm:$0xff] %v1426
    %1459 = vst [vmem:[#allocation5 + $0xc8] sm:$0xff] %v1427
    %1460 = vst [vmem:[#allocation5 + $0xd0] sm:$0xff] %v1428
    %1461 = vst [vmem:[#allocation5 + $0xd8] sm:$0xff] %v1429
    %1462 = vst [vmem:[#allocation5 + $0xe0] sm:$0xff] %v1430
    %1463 = vst [vmem:[#allocation5 + $0xe8] sm:$0xff] %v1431
    %1464 = vst [vmem:[#allocation5 + $0xf0] sm:$0xff] %v1432
    %1465 = vst [vmem:[#allocation5 + $0xf8] sm:$0xff] %v1433
    %v1466 = vld [vmem:[%s57] sm:$0xff]
    %v1467 = vld [vmem:[%s57 + $0x8] sm:$0xff]
    %v1468 = vld [vmem:[%s57 + $0x10] sm:$0xff]
    %v1469 = vld [vmem:[%s57 + $0x18] sm:$0xff]
    %v1470 = vld [vmem:[%s57 + $0x20] sm:$0xff]
    %v1471 = vld [vmem:[%s57 + $0x28] sm:$0xff]
    %v1472 = vld [vmem:[%s57 + $0x30] sm:$0xff]
    %v1473 = vld [vmem:[%s57 + $0x38] sm:$0xff]
    %v1474 = vld [vmem:[%s57 + $0x40] sm:$0xff]
    %v1475 = vld [vmem:[%s57 + $0x48] sm:$0xff]
    %v1476 = vld [vmem:[%s57 + $0x50] sm:$0xff]
    %v1477 = vld [vmem:[%s57 + $0x58] sm:$0xff]
    %v1478 = vld [vmem:[%s57 + $0x60] sm:$0xff]
    %v1479 = vld [vmem:[%s57 + $0x68] sm:$0xff]
    %v1480 = vld [vmem:[%s57 + $0x70] sm:$0xff]
    %v1481 = vld [vmem:[%s57 + $0x78] sm:$0xff]
    %v1482 = vld [vmem:[%s57 + $0x80] sm:$0xff]
    %v1483 = vld [vmem:[%s57 + $0x88] sm:$0xff]
    %v1484 = vld [vmem:[%s57 + $0x90] sm:$0xff]
    %v1485 = vld [vmem:[%s57 + $0x98] sm:$0xff]
    %v1486 = vld [vmem:[%s57 + $0xa0] sm:$0xff]
    %v1487 = vld [vmem:[%s57 + $0xa8] sm:$0xff]
    %v1488 = vld [vmem:[%s57 + $0xb0] sm:$0xff]
    %v1489 = vld [vmem:[%s57 + $0xb8] sm:$0xff]
    %v1490 = vld [vmem:[%s57 + $0xc0] sm:$0xff]
    %v1491 = vld [vmem:[%s57 + $0xc8] sm:$0xff]
    %v1492 = vld [vmem:[%s57 + $0xd0] sm:$0xff]
    %v1493 = vld [vmem:[%s57 + $0xd8] sm:$0xff]
    %v1494 = vld [vmem:[%s57 + $0xe0] sm:$0xff]
    %v1495 = vld [vmem:[%s57 + $0xe8] sm:$0xff]
    %v1496 = vld [vmem:[%s57 + $0xf0] sm:$0xff]
    %v1497 = vld [vmem:[%s57 + $0xf8] sm:$0xff]
    %v1498 = vmul.f32 %v1466, %v1322
    %v1499 = vmul.f32 %v1467, %v1322
    %v1500 = vmul.f32 %v1468, %v1323
    %v1501 = vmul.f32 %v1469, %v1323
    %v1502 = vmul.f32 %v1470, %v1324
    %v1503 = vmul.f32 %v1471, %v1324
    %v1504 = vmul.f32 %v1472, %v1325
    %v1505 = vmul.f32 %v1473, %v1325
    %v1506 = vmul.f32 %v1474, %v1326
    %v1507 = vmul.f32 %v1475, %v1326
    %v1508 = vmul.f32 %v1476, %v1327
    %v1509 = vmul.f32 %v1477, %v1327
    %v1510 = vmul.f32 %v1478, %v1328
    %v1511 = vmul.f32 %v1479, %v1328
    %v1512 = vmul.f32 %v1480, %v1329
    %v1513 = vmul.f32 %v1481, %v1329
    %v1514 = vmul.f32 %v1482, %v1330
    %v1515 = vmul.f32 %v1483, %v1330
    %v1516 = vmul.f32 %v1484, %v1331
    %v1517 = vmul.f32 %v1485, %v1331
    %v1518 = vmul.f32 %v1486, %v1332
    %v1519 = vmul.f32 %v1487, %v1332
    %v1520 = vmul.f32 %v1488, %v1333
    %v1521 = vmul.f32 %v1489, %v1333
    %v1522 = vmul.f32 %v1490, %v1334
    %v1523 = vmul.f32 %v1491, %v1334
    %v1524 = vmul.f32 %v1492, %v1335
    %v1525 = vmul.f32 %v1493, %v1335
    %v1526 = vmul.f32 %v1494, %v1336
    %v1527 = vmul.f32 %v1495, %v1336
    %v1528 = vmul.f32 %v1496, %v1337
    %v1529 = vmul.f32 %v1497, %v1337
    %v1530 = vadd.f32 %v1498, %v1354
    %v1531 = vadd.f32 %v1499, %v1354
    %v1532 = vadd.f32 %v1500, %v1355
    %v1533 = vadd.f32 %v1501, %v1355
    %v1534 = vadd.f32 %v1502, %v1356
    %v1535 = vadd.f32 %v1503, %v1356
    %v1536 = vadd.f32 %v1504, %v1357
    %v1537 = vadd.f32 %v1505, %v1357
    %v1538 = vadd.f32 %v1506, %v1358
    %v1539 = vadd.f32 %v1507, %v1358
    %v1540 = vadd.f32 %v1508, %v1359
    %v1541 = vadd.f32 %v1509, %v1359
    %v1542 = vadd.f32 %v1510, %v1360
    %v1543 = vadd.f32 %v1511, %v1360
    %v1544 = vadd.f32 %v1512, %v1361
    %v1545 = vadd.f32 %v1513, %v1361
    %v1546 = vadd.f32 %v1514, %v1362
    %v1547 = vadd.f32 %v1515, %v1362
    %v1548 = vadd.f32 %v1516, %v1363
    %v1549 = vadd.f32 %v1517, %v1363
    %v1550 = vadd.f32 %v1518, %v1364
    %v1551 = vadd.f32 %v1519, %v1364
    %v1552 = vadd.f32 %v1520, %v1365
    %v1553 = vadd.f32 %v1521, %v1365
    %v1554 = vadd.f32 %v1522, %v1366
    %v1555 = vadd.f32 %v1523, %v1366
    %v1556 = vadd.f32 %v1524, %v1367
    %v1557 = vadd.f32 %v1525, %v1367
    %v1558 = vadd.f32 %v1526, %v1368
    %v1559 = vadd.f32 %v1527, %v1368
    %v1560 = vadd.f32 %v1528, %v1369
    %v1561 = vadd.f32 %v1529, %v1369
    %s1562 = scalar_lea.vmem [#allocation5], 256
    %1563 = vst [vmem:[%s1562] sm:$0xff] %v1530
    %1564 = vst [vmem:[%s1562 + $0x8] sm:$0xff] %v1531
    %1565 = vst [vmem:[%s1562 + $0x10] sm:$0xff] %v1532
    %1566 = vst [vmem:[%s1562 + $0x18] sm:$0xff] %v1533
    %1567 = vst [vmem:[%s1562 + $0x20] sm:$0xff] %v1534
    %1568 = vst [vmem:[%s1562 + $0x28] sm:$0xff] %v1535
    %1569 = vst [vmem:[%s1562 + $0x30] sm:$0xff] %v1536
    %1570 = vst [vmem:[%s1562 + $0x38] sm:$0xff] %v1537
    %1571 = vst [vmem:[%s1562 + $0x40] sm:$0xff] %v1538
    %1572 = vst [vmem:[%s1562 + $0x48] sm:$0xff] %v1539
    %1573 = vst [vmem:[%s1562 + $0x50] sm:$0xff] %v1540
    %1574 = vst [vmem:[%s1562 + $0x58] sm:$0xff] %v1541
    %1575 = vst [vmem:[%s1562 + $0x60] sm:$0xff] %v1542
    %1576 = vst [vmem:[%s1562 + $0x68] sm:$0xff] %v1543
    %1577 = vst [vmem:[%s1562 + $0x70] sm:$0xff] %v1544
    %1578 = vst [vmem:[%s1562 + $0x78] sm:$0xff] %v1545
    %1579 = vst [vmem:[%s1562 + $0x80] sm:$0xff] %v1546
    %1580 = vst [vmem:[%s1562 + $0x88] sm:$0xff] %v1547
    %1581 = vst [vmem:[%s1562 + $0x90] sm:$0xff] %v1548
    %1582 = vst [vmem:[%s1562 + $0x98] sm:$0xff] %v1549
    %1583 = vst [vmem:[%s1562 + $0xa0] sm:$0xff] %v1550
    %1584 = vst [vmem:[%s1562 + $0xa8] sm:$0xff] %v1551
    %1585 = vst [vmem:[%s1562 + $0xb0] sm:$0xff] %v1552
    %1586 = vst [vmem:[%s1562 + $0xb8] sm:$0xff] %v1553
    %1587 = vst [vmem:[%s1562 + $0xc0] sm:$0xff] %v1554
    %1588 = vst [vmem:[%s1562 + $0xc8] sm:$0xff] %v1555
    %1589 = vst [vmem:[%s1562 + $0xd0] sm:$0xff] %v1556
    %1590 = vst [vmem:[%s1562 + $0xd8] sm:$0xff] %v1557
    %1591 = vst [vmem:[%s1562 + $0xe0] sm:$0xff] %v1558
    %1592 = vst [vmem:[%s1562 + $0xe8] sm:$0xff] %v1559
    %1593 = vst [vmem:[%s1562 + $0xf0] sm:$0xff] %v1560
    %1594 = vst [vmem:[%s1562 + $0xf8] sm:$0xff] %v1561
    // Predicated region
    $region10: #{tpu_custom_call.1} parent=1 // pred_check
      _
    $region11: #{tpu_custom_call.1} parent=1 // pred_check_branch
      %1596 = sbr.rel (0) target = $region13
    $region12: #{tpu_custom_call.1} parent=1 // pred_region
      %1598 = vsyncadd [#allocation4], 0
      %s1599 = sshll.u32 [#allocation5], 4
      %s1600 = int_to_ptr.vmem [resolvable:$true] %s1599
      %s1601 = sshll.u32 %s1, 4
      %s1602 = int_to_ptr.hbm [resolvable:$true] %s1601
      %1607 = dma.vmem_to_hbm [thread:$0]  %s1600, 8192, %s1602, [#allocation4], 256, 256, 16
    $region13: #{tpu_custom_call.1} parent=1 // pred_fallthru
      _
    // Predicated region
    $region14: #{tpu_custom_call.1} parent=1 // pred_check
      _
    $region15: #{tpu_custom_call.1} parent=1 // pred_check_branch
      %1609 = sbr.rel (0) target = $region17
    $region16: #{tpu_custom_call.1} parent=1 // pred_region
      %1611 = dma.done [#allocation4], 8192
    $region17: #{tpu_custom_call.1} parent=1 // pred_fallthru
      _
    %1612 = vsyncpa [#allocation3], 1
    %1613 = vsyncpa [#allocation4], 1

</llo_original>
